<compile_context>
chip_gen: v6e
topology: v6e:2x2x1
jax: 0.10.0
libtpu: 0.0.40
codegen_flags: <defaults>
</compile_context>

<pallas_src>
import functools
import math

import numpy as np

import jax
import jax.numpy as jnp
from jax.experimental import pallas as pl
from jax.experimental.pallas import tpu as pltpu

D_MODEL = 32
NHEAD = 4
HEAD_DIM = D_MODEL // NHEAD
DIM_FF = 64
EPS = 1e-5

SLAB_LANES = 128  # lane width of the packed parameter slabs / padded output

# Row offsets (sublanes) of each pre-transposed (in, out) weight in the weight slab.
_W_SA_QKV = 0                         # (D, 3D)
_W_SA_OUT = _W_SA_QKV + D_MODEL       # (D, D)
_W_CA_Q = _W_SA_OUT + D_MODEL         # (D, D)
_W_CA_KV = _W_CA_Q + D_MODEL          # (D, 2D)
_W_CA_OUT = _W_CA_KV + D_MODEL        # (D, D)
_W_FF1 = _W_CA_OUT + D_MODEL          # (D, FF)
_W_FF2 = _W_FF1 + D_MODEL             # (FF, D), zero-padded to 128 rows
_W_ROWS = _W_FF2 + SLAB_LANES         # 320 rows total

# Row index of each bias / LayerNorm parameter in the bias slab.
(_B_SA_QKV, _B_SA_OUT, _B_CA_Q, _B_CA_KV, _B_CA_OUT, _B_FF1, _B_FF2,
 _B_LN1_G, _B_LN1_B, _B_LN2_G, _B_LN2_B, _B_LN3_G, _B_LN3_B) = range(13)
_B_FEAT = 13                          # (NHEAD, D) head -> feature-column map
_B_ROWS = 24


# ------------------------------ in-kernel helpers ------------------------------

def _layer_norm(x, gamma, beta, eps=EPS):
    mu = jnp.mean(x, axis=-1, keepdims=True)
    var = jnp.mean((x - mu) ** 2, axis=-1, keepdims=True)
    return (x - mu) * jax.lax.rsqrt(var + eps) * gamma + beta


def _fused_mha(q, k, v, kvseg, addmask, featmap, *, nhead, head_dim, n_kv):
    """Multi-head attention for all heads / all examples of the block at once.

    q: (n_q, D) f32, k/v: (n_kv, D) f32, D = nhead*head_dim.
    kvseg:   (nhead*n_kv, 128) bf16, [:, :D] block-diagonal head mask,
             [:, D:D+nhead] head-segment indicator (both precomputed on host).
    addmask: (n_q, nhead*n_kv) f32 additive cross-example mask (0 / -1e30).
    featmap: (nhead, D) f32, featmap[h, c] = 1 iff column c belongs to head h.
    """
    d = nhead * head_dim
    kvmask = kvseg[:, 0:d]                     # (hs, d)   bf16 0/1
    segmap = kvseg[:, d:d + nhead]             # (hs, nh)  bf16 0/1

    # Block-diagonal K/V: row h*n_kv + j is live only on head h's columns.
    kbig = jnp.concatenate([k.astype(jnp.bfloat16)] * nhead, axis=0) * kvmask
    vbig = jnp.concatenate([v.astype(jnp.bfloat16)] * nhead, axis=0) * kvmask

    # scores[r, h*n_kv + j] = <q[r], k[j]> restricted to head h's features.
    sc = jax.lax.dot_general(q.astype(jnp.bfloat16), kbig,
                             (((1,), (1,)), ((), ())),
                             preferred_element_type=jnp.float32)
    sc = sc * (1.0 / math.sqrt(head_dim)) + addmask

    # Shared per-row max is a valid stabilizer for the small score ranges here.
    e = jnp.exp(sc - jnp.max(sc, axis=-1, keepdims=True))        # f32
    eb = e.astype(jnp.bfloat16)

    # Per-(row, head) denominators via one thin matmul, applied after the
    # value matmul (each output column belongs to exactly one head).
    denom = jnp.dot(eb, segmap, preferred_element_type=jnp.float32)   # (n_q, nh)
    out_un = jnp.dot(eb, vbig, preferred_element_type=jnp.float32)    # (n_q, d)
    scale = jnp.dot(pl.reciprocal(denom, approx=True), featmap,
                    preferred_element_type=jnp.float32)                # (n_q, d)
    return out_un * scale


# --------------------------------- Pallas kernel --------------------------------

def _decoder_layer_kernel(tgt_ref, mem_ref, w_ref, b_ref,
                          kvseg_sa_ref, add_sa_ref, kvseg_ca_ref, add_ca_ref,
                          out_ref, *, n_ex, t_len, s_len):
    D, FF = D_MODEL, DIM_FF

    def matmul(lhs, w_row, w_rows, b_row):
        # Full 128-lane weight block + bias row (zero padded) -> (n, 128) f32.
        y = jnp.dot(lhs.astype(jnp.bfloat16), w_ref[w_row:w_row + w_rows, :],
                    preferred_element_type=jnp.float32)
        return y + b_ref[b_row:b_row + 1, :]

    def ln_param(row):
        return b_ref[row:row + 1, 0:D]

    featmap = b_ref[_B_FEAT:_B_FEAT + NHEAD, 0:D]      # (nhead, D) f32

    x = tgt_ref[...]          # (n_ex*t_len, D) f32
    mem = mem_ref[...]        # (n_ex*s_len, D) f32

    # ---- self-attention block (post-norm) ----
    qkv = matmul(x, _W_SA_QKV, D, _B_SA_QKV)            # (n, 128)
    sa = _fused_mha(qkv[:, 0:D], qkv[:, D:2 * D], qkv[:, 2 * D:3 * D],
                    kvseg_sa_ref[...], add_sa_ref[...], featmap,
                    nhead=NHEAD, head_dim=HEAD_DIM, n_kv=n_ex * t_len)
    sa = matmul(sa, _W_SA_OUT, D, _B_SA_OUT)[:, 0:D]
    x = _layer_norm(x + sa, ln_param(_B_LN1_G), ln_param(_B_LN1_B))

    # ---- cross-attention block ----
    q = matmul(x, _W_CA_Q, D, _B_CA_Q)[:, 0:D]
    kv = matmul(mem, _W_CA_KV, D, _B_CA_KV)             # (n_mem, 128)
    ca = _fused_mha(q, kv[:, 0:D], kv[:, D:2 * D],
                    kvseg_ca_ref[...], add_ca_ref[...], featmap,
                    nhead=NHEAD, head_dim=HEAD_DIM, n_kv=n_ex * s_len)
    ca = matmul(ca, _W_CA_OUT, D, _B_CA_OUT)[:, 0:D]
    x = _layer_norm(x + ca, ln_param(_B_LN2_G), ln_param(_B_LN2_B))

    # ---- feed-forward block (ReLU) ----
    h = jnp.maximum(matmul(x, _W_FF1, D, _B_FF1), 0.0)  # (n, 128), cols>=FF are 0
    ff = matmul(h, _W_FF2, SLAB_LANES, _B_FF2)[:, 0:D]  # zero-padded FF2 rows
    x = _layer_norm(x + ff, ln_param(_B_LN3_G), ln_param(_B_LN3_B))

    # Lane-dense (128-wide) store: full unmasked vst; wrapper strips padding.
    pad = jnp.zeros((x.shape[0], SLAB_LANES - D), x.dtype)
    out_ref[...] = jnp.concatenate([x, pad], axis=-1).astype(out_ref.dtype)


# ----------------------------- host-side constant prep --------------------------

def _pack_params(params):
    """Pre-transpose weights to (in, out), split cross-attn in-proj into q / kv,
    and pack everything into a bf16 weight slab + f32 bias/LN/featmap slab."""
    D = D_MODEL

    def wblk(w_t, rows=None):
        r = w_t.shape[0] if rows is None else rows
        blk = jnp.zeros((r, SLAB_LANES), jnp.float32)
        return blk.at[:w_t.shape[0], :w_t.shape[1]].set(w_t.astype(jnp.float32))

    w_slab = jnp.concatenate([
        wblk(params["sa_in_w"].T),                 # (D, 3D) fused q|k|v
        wblk(params["sa_out_w"].T),                # (D, D)
        wblk(params["ca_in_w"][:D].T),             # (D, D)   q projection
        wblk(params["ca_in_w"][D:].T),             # (D, 2D)  fused k|v projection
        wblk(params["ca_out_w"].T),                # (D, D)
        wblk(params["lin1_w"].T),                  # (D, FF)
        wblk(params["lin2_w"].T, rows=SLAB_LANES), # (FF, D) zero-padded to 128 rows
    ], axis=0).astype(jnp.bfloat16)                # (_W_ROWS, 128) bf16

    b_rows = [
        params["sa_in_b"], params["sa_out_b"],
        params["ca_in_b"][:D], params["ca_in_b"][D:],
        params["ca_out_b"], params["lin1_b"], params["lin2_b"],
        params["ln1_g"], params["ln1_b"],
        params["ln2_g"], params["ln2_b"],
        params["ln3_g"], params["ln3_b"],
    ]
    b_slab = jnp.zeros((_B_ROWS, SLAB_LANES), jnp.float32)
    for i, r in enumerate(b_rows):
        b_slab = b_slab.at[i, : r.shape[0]].set(r.astype(jnp.float32))
    feat = (jnp.arange(D)[None, :] // HEAD_DIM
            == jnp.arange(NHEAD)[:, None]).astype(jnp.float32)
    b_slab = b_slab.at[_B_FEAT:_B_FEAT + NHEAD, :D].set(feat)
    return w_slab, b_slab


def _make_kvseg(n_kv):
    """(NHEAD*n_kv, 128) bf16: [:, :D] block-diag head mask, [:, D:D+NHEAD] seg map."""
    hs = NHEAD * n_kv
    row_head = np.arange(hs) // n_kv
    kvmask = (row_head[:, None] == (np.arange(D_MODEL) // HEAD_DIM)[None, :])
    segmap = (row_head[:, None] == np.arange(NHEAD)[None, :])
    slab = np.zeros((hs, SLAB_LANES), np.float32)
    slab[:, :D_MODEL] = kvmask
    slab[:, D_MODEL:D_MODEL + NHEAD] = segmap
    return jnp.asarray(slab, dtype=jnp.bfloat16)


def _make_addmask(n_ex, q_len, kv_len):
    """(n_ex*q_len, NHEAD*n_ex*kv_len) f32 additive cross-example mask."""
    n_q = n_ex * q_len
    hs = NHEAD * n_ex * kv_len
    q_ex = np.arange(n_q) // q_len
    kv_ex = (np.arange(hs) % (n_ex * kv_len)) // kv_len
    mask = np.where(q_ex[:, None] == kv_ex[None, :], 0.0, -1e30).astype(np.float32)
    return jnp.asarray(mask)


def _pick_batch_block(B, T, S, cap=16):
    """Largest layout-legal block <= cap, preferring >= 2 grid steps (v7x)."""
    def legal(bb):
        return (B % bb == 0
                and ((bb * T) % 8 == 0 or bb == B)
                and ((bb * S) % 8 == 0 or bb == B))
    best = None
    for bb in range(min(B, cap), 0, -1):
        if not legal(bb):
            continue
        if best is None:
            best = bb
        if B // bb >= 2:
            return bb
    return best if best is not None else B


# ----------------------------------- wrapper ------------------------------------

def transformer_cross_attention_block(tgt, memory, params, batch_block=None):
    """tgt: (B, T, D), memory: (B, S, D) -> (B, T, D)."""
    B, T, D = tgt.shape
    S = memory.shape[1]
    assert D == D_MODEL and memory.shape[0] == B

    if batch_block is None:
        batch_block = _pick_batch_block(B, T, S)
    assert B % batch_block == 0, "batch must be divisible by batch_block"
    assert (batch_block * T) % 8 == 0 or batch_block == B
    assert (batch_block * S) % 8 == 0 or batch_block == B
    n_blocks = B // batch_block

    w_slab, b_slab = _pack_params(params)
    kvseg_sa = _make_kvseg(batch_block * T)
    kvseg_ca = _make_kvseg(batch_block * S)
    add_sa = _make_addmask(batch_block, T, T)
    add_ca = _make_addmask(batch_block, T, S)

    tgt_flat = tgt.reshape(B * T, D).astype(jnp.float32)
    mem_flat = memory.reshape(B * S, D).astype(jnp.float32)

    kernel = functools.partial(_decoder_layer_kernel,
                               n_ex=batch_block, t_len=T, s_len=S)

    # Note: the five parameter/mask inputs are resident (constant index_map);
    # Pallas may double-buffer them but they total well under 200 KiB.
    out_padded = pl.pallas_call(
        kernel,
        out_shape=jax.ShapeDtypeStruct((B * T, SLAB_LANES), jnp.float32),
        grid_spec=pltpu.PrefetchScalarGridSpec(
            num_scalar_prefetch=0,
            grid=(n_blocks,),
            in_specs=[
                pl.BlockSpec((batch_block * T, D), lambda i: (i, 0)),
                pl.BlockSpec((batch_block * S, D), lambda i: (i, 0)),
                pl.BlockSpec(w_slab.shape, lambda i: (0, 0)),
                pl.BlockSpec(b_slab.shape, lambda i: (0, 0)),
                pl.BlockSpec(kvseg_sa.shape, lambda i: (0, 0)),
                pl.BlockSpec(add_sa.shape, lambda i: (0, 0)),
                pl.BlockSpec(kvseg_ca.shape, lambda i: (0, 0)),
                pl.BlockSpec(add_ca.shape, lambda i: (0, 0)),
            ],
            out_specs=pl.BlockSpec((batch_block * T, SLAB_LANES),
                                   lambda i: (i, 0)),
        ),
        compiler_params=pltpu.CompilerParams(
            dimension_semantics=("parallel",)),
    )(tgt_flat, mem_flat, w_slab, b_slab, kvseg_sa, add_sa, kvseg_ca, add_ca)

    return out_padded[:, :D].reshape(B, T, D)


# --------------------------- pure-JAX reference (checker) -----------------------

def _ref_mha(q_in, kv_in, in_w, in_b, out_w, out_b, nhead):
    T, D = q_in.shape
    hd = D // nhead
    q = q_in @ in_w[:D].T + in_b[:D]
    k = kv_in @ in_w[D:2 * D].T + in_b[D:2 * D]
    v = kv_in @ in_w[2 * D:].T + in_b[2 * D:]
    outs = []
    for h in range(nhead):
        sl = slice(h * hd, (h + 1) * hd)
        s = (q[:, sl] @ k[:, sl].T) / math.sqrt(hd)
        outs.append(jax.nn.softmax(s, axis=-1) @ v[:, sl])
    return jnp.concatenate(outs, axis=-1) @ out_w.T + out_b


def _ref_layer_norm(x, g, b):
    mu = jnp.mean(x, axis=-1, keepdims=True)
    var = jnp.mean((x - mu) ** 2, axis=-1, keepdims=True)
    return (x - mu) * jax.lax.rsqrt(var + EPS) * g + b


def _ref_decoder_single(tgt_b, mem_b, p):
    x = tgt_b
    sa = _ref_mha(x, x, p["sa_in_w"], p["sa_in_b"], p["sa_out_w"], p["sa_out_b"], NHEAD)
    x = _ref_layer_norm(x + sa, p["ln1_g"], p["ln1_b"])
    ca = _ref_mha(x, mem_b, p["ca_in_w"], p["ca_in_b"], p["ca_out_w"], p["ca_out_b"], NHEAD)
    x = _ref_layer_norm(x + ca, p["ln2_g"], p["ln2_b"])
    h = jax.nn.relu(x @ p["lin1_w"].T + p["lin1_b"])
    ff = h @ p["lin2_w"].T + p["lin2_b"]
    return _ref_layer_norm(x + ff, p["ln3_g"], p["ln3_b"])


# ----------------------------------- driver -------------------------------------

def make_params(key):
    ks = jax.random.split(key, 12)
    scale = 0.1
    return {
        "sa_in_w":  scale * jax.random.normal(ks[0], (3 * D_MODEL, D_MODEL), jnp.float32),
        "sa_in_b":  scale * jax.random.normal(ks[1], (3 * D_MODEL,), jnp.float32),
        "sa_out_w": scale * jax.random.normal(ks[2], (D_MODEL, D_MODEL), jnp.float32),
        "sa_out_b": scale * jax.random.normal(ks[3], (D_MODEL,), jnp.float32),
        "ca_in_w":  scale * jax.random.normal(ks[4], (3 * D_MODEL, D_MODEL), jnp.float32),
        "ca_in_b":  scale * jax.random.normal(ks[5], (3 * D_MODEL,), jnp.float32),
        "ca_out_w": scale * jax.random.normal(ks[6], (D_MODEL, D_MODEL), jnp.float32),
        "ca_out_b": scale * jax.random.normal(ks[7], (D_MODEL,), jnp.float32),
        "lin1_w":   scale * jax.random.normal(ks[8], (DIM_FF, D_MODEL), jnp.float32),
        "lin1_b":   scale * jax.random.normal(ks[9], (DIM_FF,), jnp.float32),
        "lin2_w":   scale * jax.random.normal(ks[10], (D_MODEL, DIM_FF), jnp.float32),
        "lin2_b":   scale * jax.random.normal(ks[11], (D_MODEL,), jnp.float32),
        "ln1_g": jnp.ones((D_MODEL,), jnp.float32),
        "ln1_b": jnp.zeros((D_MODEL,), jnp.float32),
        "ln2_g": jnp.ones((D_MODEL,), jnp.float32),
        "ln2_b": jnp.zeros((D_MODEL,), jnp.float32),
        "ln3_g": jnp.ones((D_MODEL,), jnp.float32),
        "ln3_b": jnp.zeros((D_MODEL,), jnp.float32),
    }


if __name__ == "__main__":
    B, T, S = 2, 8, 8
    key = jax.random.PRNGKey(0)
    k_tgt, k_mem, k_par = jax.random.split(key, 3)
    tgt = jax.random.normal(k_tgt, (B, T, D_MODEL), jnp.float32)
    memory = jax.random.normal(k_mem, (B, S, D_MODEL), jnp.float32)
    params = make_params(k_par)

    out = transformer_cross_attention_block(tgt, memory, params)
    out = jax.block_until_ready(out)
    assert out.shape == (B, T, D_MODEL)

    # Pure-JAX reference check.  Tolerance accommodates bf16 MXU operands and
    # the approximate (EUP) reciprocal used for softmax normalization.
    ref = jax.vmap(_ref_decoder_single, in_axes=(0, 0, None))(tgt, memory, params)
    assert jnp.allclose(out, ref, rtol=2e-2, atol=2e-2), "mismatch vs reference"

    print("KERNEL_OK")
</pallas_src>

<mosaic_0001>
module attributes {stable_mosaic.version = 11 : i64} {
  func.func @_decoder_layer_kernel(%arg0: i32, %arg1: memref<8x32xf32, #tpu.memory_space<vmem>>, %arg2: memref<8x32xf32, #tpu.memory_space<vmem>>, %arg3: memref<320x128xbf16, #tpu.memory_space<vmem>>, %arg4: memref<24x128xf32, #tpu.memory_space<vmem>>, %arg5: memref<32x128xbf16, #tpu.memory_space<vmem>>, %arg6: memref<8x32xf32, #tpu.memory_space<vmem>>, %arg7: memref<32x128xbf16, #tpu.memory_space<vmem>>, %arg8: memref<8x32xf32, #tpu.memory_space<vmem>>, %arg9: memref<8x128xf32, #tpu.memory_space<vmem>>) attributes {dimension_semantics = [#tpu.dimension_semantics<parallel>], iteration_bounds = array<i64: 2>, scalar_prefetch = 0 : i64, scratch_operands = 0 : i64, tpu.core_type = #tpu.core_type<tc>, window_params = [{transform_indices = @transform_0, window_bounds = array<i64: 8, 32>}, {transform_indices = @transform_1, window_bounds = array<i64: 8, 32>}, {pipeline_mode = #tpu.pipeline_mode<synchronous>, transform_indices = @transform_2, window_bounds = array<i64: 320, 128>}, {pipeline_mode = #tpu.pipeline_mode<synchronous>, transform_indices = @transform_3, window_bounds = array<i64: 24, 128>}, {pipeline_mode = #tpu.pipeline_mode<synchronous>, transform_indices = @transform_4, window_bounds = array<i64: 32, 128>}, {pipeline_mode = #tpu.pipeline_mode<synchronous>, transform_indices = @transform_5, window_bounds = array<i64: 8, 32>}, {pipeline_mode = #tpu.pipeline_mode<synchronous>, transform_indices = @transform_6, window_bounds = array<i64: 32, 128>}, {pipeline_mode = #tpu.pipeline_mode<synchronous>, transform_indices = @transform_7, window_bounds = array<i64: 8, 32>}, {transform_indices = @transform_8, window_bounds = array<i64: 8, 128>}]} {
    %c13 = arith.constant 13 : index
    %c0 = arith.constant 0 : index
    %0 = vector.load %arg4[%c13, %c0] : memref<24x128xf32, #tpu.memory_space<vmem>>, vector<4x32xf32>
    %c0_0 = arith.constant 0 : index
    %c0_1 = arith.constant 0 : index
    %1 = vector.load %arg1[%c0_0, %c0_1] : memref<8x32xf32, #tpu.memory_space<vmem>>, vector<8x32xf32>
    %c0_2 = arith.constant 0 : index
    %c0_3 = arith.constant 0 : index
    %2 = vector.load %arg2[%c0_2, %c0_3] : memref<8x32xf32, #tpu.memory_space<vmem>>, vector<8x32xf32>
    %3 = arith.truncf %1 : vector<8x32xf32> to vector<8x32xbf16>
    %c0_4 = arith.constant 0 : index
    %c0_5 = arith.constant 0 : index
    %4 = vector.load %arg3[%c0_4, %c0_5] : memref<320x128xbf16, #tpu.memory_space<vmem>>, vector<32x128xbf16>
    %cst = arith.constant dense<0.000000e+00> : vector<8x128xf32>
    %5 = tpu.matmul %3, %4, %cst {dimension_numbers = #tpu.dot_dimension_numbers<[1], [0], [0], [1], [0, 0, 1, 1], [], []>} : vector<8x32xbf16>, vector<32x128xbf16>, vector<8x128xf32> -> vector<8x128xf32>
    %c0_6 = arith.constant 0 : index
    %c0_7 = arith.constant 0 : index
    %6 = vector.load %arg4[%c0_6, %c0_7] : memref<24x128xf32, #tpu.memory_space<vmem>>, vector<1x128xf32>
    %7 = vector.broadcast %6 : vector<1x128xf32> to vector<8x128xf32>
    %8 = arith.addf %5, %7 : vector<8x128xf32>
    %9 = vector.extract_strided_slice %8 {offsets = [0, 0], sizes = [8, 32], strides = [1, 1]} : vector<8x128xf32> to vector<8x32xf32>
    %10 = vector.extract_strided_slice %8 {offsets = [0, 32], sizes = [8, 32], strides = [1, 1]} : vector<8x128xf32> to vector<8x32xf32>
    %11 = vector.extract_strided_slice %8 {offsets = [0, 64], sizes = [8, 32], strides = [1, 1]} : vector<8x128xf32> to vector<8x32xf32>
    %c0_8 = arith.constant 0 : index
    %c0_9 = arith.constant 0 : index
    %12 = vector.load %arg5[%c0_8, %c0_9] : memref<32x128xbf16, #tpu.memory_space<vmem>>, vector<32x128xbf16>
    %c0_10 = arith.constant 0 : index
    %c0_11 = arith.constant 0 : index
    %13 = vector.load %arg6[%c0_10, %c0_11] : memref<8x32xf32, #tpu.memory_space<vmem>>, vector<8x32xf32>
    %14 = vector.extract_strided_slice %12 {offsets = [0, 0], sizes = [32, 32], strides = [1, 1]} : vector<32x128xbf16> to vector<32x32xbf16>
    %15 = vector.extract_strided_slice %12 {offsets = [0, 32], sizes = [32, 4], strides = [1, 1]} : vector<32x128xbf16> to vector<32x4xbf16>
    %16 = arith.truncf %10 : vector<8x32xf32> to vector<8x32xbf16>
    %17 = tpu.concatenate %16, %16, %16, %16 in 0 : vector<8x32xbf16>, vector<8x32xbf16>, vector<8x32xbf16>, vector<8x32xbf16> -> vector<32x32xbf16>
    %18 = arith.mulf %17, %14 : vector<32x32xbf16>
    %19 = arith.truncf %11 : vector<8x32xf32> to vector<8x32xbf16>
    %20 = tpu.concatenate %19, %19, %19, %19 in 0 : vector<8x32xbf16>, vector<8x32xbf16>, vector<8x32xbf16>, vector<8x32xbf16> -> vector<32x32xbf16>
    %21 = arith.mulf %20, %14 : vector<32x32xbf16>
    %22 = arith.truncf %9 : vector<8x32xf32> to vector<8x32xbf16>
    %cst_12 = arith.constant dense<0.000000e+00> : vector<8x32xf32>
    %23 = tpu.matmul %22, %18, %cst_12 {dimension_numbers = #tpu.dot_dimension_numbers<[1], [1], [0], [0], [0, 0, 1, 0], [], []>} : vector<8x32xbf16>, vector<32x32xbf16>, vector<8x32xf32> -> vector<8x32xf32>
    %cst_13 = arith.constant 0.353553385 : f32
    %24 = vector.broadcast %cst_13 : f32 to vector<8x32xf32>
    %25 = arith.mulf %23, %24 : vector<8x32xf32>
    %26 = arith.addf %25, %13 : vector<8x32xf32>
    %cst_14 = arith.constant dense<0xFF800000> : vector<8xf32>
    %27 = vector.multi_reduction <maximumf>, %26, %cst_14 [1] : vector<8x32xf32> to vector<8xf32>
    %28 = vector.shape_cast %27 : vector<8xf32> to vector<8x1xf32>
    %29 = vector.broadcast %28 : vector<8x1xf32> to vector<8x32xf32>
    %30 = arith.subf %26, %29 : vector<8x32xf32>
    %31 = math.exp %30 : vector<8x32xf32>
    %32 = arith.truncf %31 : vector<8x32xf32> to vector<8x32xbf16>
    %cst_15 = arith.constant dense<0.000000e+00> : vector<8x4xf32>
    %33 = tpu.matmul %32, %15, %cst_15 {dimension_numbers = #tpu.dot_dimension_numbers<[1], [0], [0], [1], [0, 0, 1, 1], [], []>} : vector<8x32xbf16>, vector<32x4xbf16>, vector<8x4xf32> -> vector<8x4xf32>
    %cst_16 = arith.constant dense<0.000000e+00> : vector<8x32xf32>
    %34 = tpu.matmul %32, %21, %cst_16 {dimension_numbers = #tpu.dot_dimension_numbers<[1], [0], [0], [1], [0, 0, 1, 1], [], []>} : vector<8x32xbf16>, vector<32x32xbf16>, vector<8x32xf32> -> vector<8x32xf32>
    %35 = tpu.reciprocal %33 {approx = true} : vector<8x4xf32> -> vector<8x4xf32>
    %cst_17 = arith.constant dense<0.000000e+00> : vector<8x32xf32>
    %36 = tpu.matmul %35, %0, %cst_17 {dimension_numbers = #tpu.dot_dimension_numbers<[1], [0], [0], [1], [0, 0, 1, 1], [], []>} : vector<8x4xf32>, vector<4x32xf32>, vector<8x32xf32> -> vector<8x32xf32>
    %37 = arith.mulf %34, %36 : vector<8x32xf32>
    %38 = arith.truncf %37 : vector<8x32xf32> to vector<8x32xbf16>
    %c32 = arith.constant 32 : index
    %c0_18 = arith.constant 0 : index
    %39 = vector.load %arg3[%c32, %c0_18] : memref<320x128xbf16, #tpu.memory_space<vmem>>, vector<32x128xbf16>
    %cst_19 = arith.constant dense<0.000000e+00> : vector<8x128xf32>
    %40 = tpu.matmul %38, %39, %cst_19 {dimension_numbers = #tpu.dot_dimension_numbers<[1], [0], [0], [1], [0, 0, 1, 1], [], []>} : vector<8x32xbf16>, vector<32x128xbf16>, vector<8x128xf32> -> vector<8x128xf32>
    %c1 = arith.constant 1 : index
    %c0_20 = arith.constant 0 : index
    %41 = vector.load %arg4[%c1, %c0_20] : memref<24x128xf32, #tpu.memory_space<vmem>>, vector<1x128xf32>
    %42 = vector.broadcast %41 : vector<1x128xf32> to vector<8x128xf32>
    %43 = arith.addf %40, %42 : vector<8x128xf32>
    %44 = vector.extract_strided_slice %43 {offsets = [0, 0], sizes = [8, 32], strides = [1, 1]} : vector<8x128xf32> to vector<8x32xf32>
    %45 = arith.addf %1, %44 : vector<8x32xf32>
    %c7 = arith.constant 7 : index
    %c0_21 = arith.constant 0 : index
    %46 = vector.load %arg4[%c7, %c0_21] : memref<24x128xf32, #tpu.memory_space<vmem>>, vector<1x32xf32>
    %c8 = arith.constant 8 : index
    %c0_22 = arith.constant 0 : index
    %47 = vector.load %arg4[%c8, %c0_22] : memref<24x128xf32, #tpu.memory_space<vmem>>, vector<1x32xf32>
    %cst_23 = arith.constant dense<0.000000e+00> : vector<8xf32>
    %48 = vector.multi_reduction <add>, %45, %cst_23 [1] : vector<8x32xf32> to vector<8xf32>
    %49 = vector.shape_cast %48 : vector<8xf32> to vector<8x1xf32>
    %cst_24 = arith.constant 3.200000e+01 : f32
    %50 = vector.broadcast %cst_24 : f32 to vector<8x1xf32>
    %51 = arith.divf %49, %50 : vector<8x1xf32>
    %52 = vector.broadcast %51 : vector<8x1xf32> to vector<8x32xf32>
    %53 = arith.subf %45, %52 : vector<8x32xf32>
    %54 = arith.mulf %53, %53 : vector<8x32xf32>
    %cst_25 = arith.constant dense<0.000000e+00> : vector<8xf32>
    %55 = vector.multi_reduction <add>, %54, %cst_25 [1] : vector<8x32xf32> to vector<8xf32>
    %56 = vector.shape_cast %55 : vector<8xf32> to vector<8x1xf32>
    %cst_26 = arith.constant 3.200000e+01 : f32
    %57 = vector.broadcast %cst_26 : f32 to vector<8x1xf32>
    %58 = arith.divf %56, %57 : vector<8x1xf32>
    %59 = vector.broadcast %51 : vector<8x1xf32> to vector<8x32xf32>
    %60 = arith.subf %45, %59 : vector<8x32xf32>
    %cst_27 = arith.constant 9.99999974E-6 : f32
    %61 = vector.broadcast %cst_27 : f32 to vector<8x1xf32>
    %62 = arith.addf %58, %61 : vector<8x1xf32>
    %63 = math.rsqrt %62 : vector<8x1xf32>
    %64 = vector.broadcast %63 : vector<8x1xf32> to vector<8x32xf32>
    %65 = arith.mulf %60, %64 : vector<8x32xf32>
    %66 = vector.broadcast %46 : vector<1x32xf32> to vector<8x32xf32>
    %67 = arith.mulf %65, %66 : vector<8x32xf32>
    %68 = vector.broadcast %47 : vector<1x32xf32> to vector<8x32xf32>
    %69 = arith.addf %67, %68 : vector<8x32xf32>
    %70 = arith.truncf %69 : vector<8x32xf32> to vector<8x32xbf16>
    %c64 = arith.constant 64 : index
    %c0_28 = arith.constant 0 : index
    %71 = vector.load %arg3[%c64, %c0_28] : memref<320x128xbf16, #tpu.memory_space<vmem>>, vector<32x128xbf16>
    %cst_29 = arith.constant dense<0.000000e+00> : vector<8x128xf32>
    %72 = tpu.matmul %70, %71, %cst_29 {dimension_numbers = #tpu.dot_dimension_numbers<[1], [0], [0], [1], [0, 0, 1, 1], [], []>} : vector<8x32xbf16>, vector<32x128xbf16>, vector<8x128xf32> -> vector<8x128xf32>
    %c2 = arith.constant 2 : index
    %c0_30 = arith.constant 0 : index
    %73 = vector.load %arg4[%c2, %c0_30] : memref<24x128xf32, #tpu.memory_space<vmem>>, vector<1x128xf32>
    %74 = vector.broadcast %73 : vector<1x128xf32> to vector<8x128xf32>
    %75 = arith.addf %72, %74 : vector<8x128xf32>
    %76 = vector.extract_strided_slice %75 {offsets = [0, 0], sizes = [8, 32], strides = [1, 1]} : vector<8x128xf32> to vector<8x32xf32>
    %77 = arith.truncf %2 : vector<8x32xf32> to vector<8x32xbf16>
    %c96 = arith.constant 96 : index
    %c0_31 = arith.constant 0 : index
    %78 = vector.load %arg3[%c96, %c0_31] : memref<320x128xbf16, #tpu.memory_space<vmem>>, vector<32x128xbf16>
    %cst_32 = arith.constant dense<0.000000e+00> : vector<8x128xf32>
    %79 = tpu.matmul %77, %78, %cst_32 {dimension_numbers = #tpu.dot_dimension_numbers<[1], [0], [0], [1], [0, 0, 1, 1], [], []>} : vector<8x32xbf16>, vector<32x128xbf16>, vector<8x128xf32> -> vector<8x128xf32>
    %c3 = arith.constant 3 : index
    %c0_33 = arith.constant 0 : index
    %80 = vector.load %arg4[%c3, %c0_33] : memref<24x128xf32, #tpu.memory_space<vmem>>, vector<1x128xf32>
    %81 = vector.broadcast %80 : vector<1x128xf32> to vector<8x128xf32>
    %82 = arith.addf %79, %81 : vector<8x128xf32>
    %83 = vector.extract_strided_slice %82 {offsets = [0, 0], sizes = [8, 32], strides = [1, 1]} : vector<8x128xf32> to vector<8x32xf32>
    %84 = vector.extract_strided_slice %82 {offsets = [0, 32], sizes = [8, 32], strides = [1, 1]} : vector<8x128xf32> to vector<8x32xf32>
    %c0_34 = arith.constant 0 : index
    %c0_35 = arith.constant 0 : index
    %85 = vector.load %arg7[%c0_34, %c0_35] : memref<32x128xbf16, #tpu.memory_space<vmem>>, vector<32x128xbf16>
    %c0_36 = arith.constant 0 : index
    %c0_37 = arith.constant 0 : index
    %86 = vector.load %arg8[%c0_36, %c0_37] : memref<8x32xf32, #tpu.memory_space<vmem>>, vector<8x32xf32>
    %87 = vector.extract_strided_slice %85 {offsets = [0, 0], sizes = [32, 32], strides = [1, 1]} : vector<32x128xbf16> to vector<32x32xbf16>
    %88 = vector.extract_strided_slice %85 {offsets = [0, 32], sizes = [32, 4], strides = [1, 1]} : vector<32x128xbf16> to vector<32x4xbf16>
    %89 = arith.truncf %83 : vector<8x32xf32> to vector<8x32xbf16>
    %90 = tpu.concatenate %89, %89, %89, %89 in 0 : vector<8x32xbf16>, vector<8x32xbf16>, vector<8x32xbf16>, vector<8x32xbf16> -> vector<32x32xbf16>
    %91 = arith.mulf %90, %87 : vector<32x32xbf16>
    %92 = arith.truncf %84 : vector<8x32xf32> to vector<8x32xbf16>
    %93 = tpu.concatenate %92, %92, %92, %92 in 0 : vector<8x32xbf16>, vector<8x32xbf16>, vector<8x32xbf16>, vector<8x32xbf16> -> vector<32x32xbf16>
    %94 = arith.mulf %93, %87 : vector<32x32xbf16>
    %95 = arith.truncf %76 : vector<8x32xf32> to vector<8x32xbf16>
    %cst_38 = arith.constant dense<0.000000e+00> : vector<8x32xf32>
    %96 = tpu.matmul %95, %91, %cst_38 {dimension_numbers = #tpu.dot_dimension_numbers<[1], [1], [0], [0], [0, 0, 1, 0], [], []>} : vector<8x32xbf16>, vector<32x32xbf16>, vector<8x32xf32> -> vector<8x32xf32>
    %cst_39 = arith.constant 0.353553385 : f32
    %97 = vector.broadcast %cst_39 : f32 to vector<8x32xf32>
    %98 = arith.mulf %96, %97 : vector<8x32xf32>
    %99 = arith.addf %98, %86 : vector<8x32xf32>
    %cst_40 = arith.constant dense<0xFF800000> : vector<8xf32>
    %100 = vector.multi_reduction <maximumf>, %99, %cst_40 [1] : vector<8x32xf32> to vector<8xf32>
    %101 = vector.shape_cast %100 : vector<8xf32> to vector<8x1xf32>
    %102 = vector.broadcast %101 : vector<8x1xf32> to vector<8x32xf32>
    %103 = arith.subf %99, %102 : vector<8x32xf32>
    %104 = math.exp %103 : vector<8x32xf32>
    %105 = arith.truncf %104 : vector<8x32xf32> to vector<8x32xbf16>
    %cst_41 = arith.constant dense<0.000000e+00> : vector<8x4xf32>
    %106 = tpu.matmul %105, %88, %cst_41 {dimension_numbers = #tpu.dot_dimension_numbers<[1], [0], [0], [1], [0, 0, 1, 1], [], []>} : vector<8x32xbf16>, vector<32x4xbf16>, vector<8x4xf32> -> vector<8x4xf32>
    %cst_42 = arith.constant dense<0.000000e+00> : vector<8x32xf32>
    %107 = tpu.matmul %105, %94, %cst_42 {dimension_numbers = #tpu.dot_dimension_numbers<[1], [0], [0], [1], [0, 0, 1, 1], [], []>} : vector<8x32xbf16>, vector<32x32xbf16>, vector<8x32xf32> -> vector<8x32xf32>
    %108 = tpu.reciprocal %106 {approx = true} : vector<8x4xf32> -> vector<8x4xf32>
    %cst_43 = arith.constant dense<0.000000e+00> : vector<8x32xf32>
    %109 = tpu.matmul %108, %0, %cst_43 {dimension_numbers = #tpu.dot_dimension_numbers<[1], [0], [0], [1], [0, 0, 1, 1], [], []>} : vector<8x4xf32>, vector<4x32xf32>, vector<8x32xf32> -> vector<8x32xf32>
    %110 = arith.mulf %107, %109 : vector<8x32xf32>
    %111 = arith.truncf %110 : vector<8x32xf32> to vector<8x32xbf16>
    %c128 = arith.constant 128 : index
    %c0_44 = arith.constant 0 : index
    %112 = vector.load %arg3[%c128, %c0_44] : memref<320x128xbf16, #tpu.memory_space<vmem>>, vector<32x128xbf16>
    %cst_45 = arith.constant dense<0.000000e+00> : vector<8x128xf32>
    %113 = tpu.matmul %111, %112, %cst_45 {dimension_numbers = #tpu.dot_dimension_numbers<[1], [0], [0], [1], [0, 0, 1, 1], [], []>} : vector<8x32xbf16>, vector<32x128xbf16>, vector<8x128xf32> -> vector<8x128xf32>
    %c4 = arith.constant 4 : index
    %c0_46 = arith.constant 0 : index
    %114 = vector.load %arg4[%c4, %c0_46] : memref<24x128xf32, #tpu.memory_space<vmem>>, vector<1x128xf32>
    %115 = vector.broadcast %114 : vector<1x128xf32> to vector<8x128xf32>
    %116 = arith.addf %113, %115 : vector<8x128xf32>
    %117 = vector.extract_strided_slice %116 {offsets = [0, 0], sizes = [8, 32], strides = [1, 1]} : vector<8x128xf32> to vector<8x32xf32>
    %118 = arith.addf %69, %117 : vector<8x32xf32>
    %c9 = arith.constant 9 : index
    %c0_47 = arith.constant 0 : index
    %119 = vector.load %arg4[%c9, %c0_47] : memref<24x128xf32, #tpu.memory_space<vmem>>, vector<1x32xf32>
    %c10 = arith.constant 10 : index
    %c0_48 = arith.constant 0 : index
    %120 = vector.load %arg4[%c10, %c0_48] : memref<24x128xf32, #tpu.memory_space<vmem>>, vector<1x32xf32>
    %cst_49 = arith.constant dense<0.000000e+00> : vector<8xf32>
    %121 = vector.multi_reduction <add>, %118, %cst_49 [1] : vector<8x32xf32> to vector<8xf32>
    %122 = vector.shape_cast %121 : vector<8xf32> to vector<8x1xf32>
    %cst_50 = arith.constant 3.200000e+01 : f32
    %123 = vector.broadcast %cst_50 : f32 to vector<8x1xf32>
    %124 = arith.divf %122, %123 : vector<8x1xf32>
    %125 = vector.broadcast %124 : vector<8x1xf32> to vector<8x32xf32>
    %126 = arith.subf %118, %125 : vector<8x32xf32>
    %127 = arith.mulf %126, %126 : vector<8x32xf32>
    %cst_51 = arith.constant dense<0.000000e+00> : vector<8xf32>
    %128 = vector.multi_reduction <add>, %127, %cst_51 [1] : vector<8x32xf32> to vector<8xf32>
    %129 = vector.shape_cast %128 : vector<8xf32> to vector<8x1xf32>
    %cst_52 = arith.constant 3.200000e+01 : f32
    %130 = vector.broadcast %cst_52 : f32 to vector<8x1xf32>
    %131 = arith.divf %129, %130 : vector<8x1xf32>
    %132 = vector.broadcast %124 : vector<8x1xf32> to vector<8x32xf32>
    %133 = arith.subf %118, %132 : vector<8x32xf32>
    %cst_53 = arith.constant 9.99999974E-6 : f32
    %134 = vector.broadcast %cst_53 : f32 to vector<8x1xf32>
    %135 = arith.addf %131, %134 : vector<8x1xf32>
    %136 = math.rsqrt %135 : vector<8x1xf32>
    %137 = vector.broadcast %136 : vector<8x1xf32> to vector<8x32xf32>
    %138 = arith.mulf %133, %137 : vector<8x32xf32>
    %139 = vector.broadcast %119 : vector<1x32xf32> to vector<8x32xf32>
    %140 = arith.mulf %138, %139 : vector<8x32xf32>
    %141 = vector.broadcast %120 : vector<1x32xf32> to vector<8x32xf32>
    %142 = arith.addf %140, %141 : vector<8x32xf32>
    %143 = arith.truncf %142 : vector<8x32xf32> to vector<8x32xbf16>
    %c160 = arith.constant 160 : index
    %c0_54 = arith.constant 0 : index
    %144 = vector.load %arg3[%c160, %c0_54] : memref<320x128xbf16, #tpu.memory_space<vmem>>, vector<32x128xbf16>
    %cst_55 = arith.constant dense<0.000000e+00> : vector<8x128xf32>
    %145 = tpu.matmul %143, %144, %cst_55 {dimension_numbers = #tpu.dot_dimension_numbers<[1], [0], [0], [1], [0, 0, 1, 1], [], []>} : vector<8x32xbf16>, vector<32x128xbf16>, vector<8x128xf32> -> vector<8x128xf32>
    %c5 = arith.constant 5 : index
    %c0_56 = arith.constant 0 : index
    %146 = vector.load %arg4[%c5, %c0_56] : memref<24x128xf32, #tpu.memory_space<vmem>>, vector<1x128xf32>
    %147 = vector.broadcast %146 : vector<1x128xf32> to vector<8x128xf32>
    %148 = arith.addf %145, %147 : vector<8x128xf32>
    %cst_57 = arith.constant 0.000000e+00 : f32
    %149 = vector.broadcast %cst_57 : f32 to vector<8x128xf32>
    %150 = arith.maximumf %148, %149 : vector<8x128xf32>
    %151 = arith.truncf %150 : vector<8x128xf32> to vector<8x128xbf16>
    %c192 = arith.constant 192 : index
    %c0_58 = arith.constant 0 : index
    %152 = vector.load %arg3[%c192, %c0_58] : memref<320x128xbf16, #tpu.memory_space<vmem>>, vector<128x128xbf16>
    %cst_59 = arith.constant dense<0.000000e+00> : vector<8x128xf32>
    %153 = tpu.matmul %151, %152, %cst_59 {dimension_numbers = #tpu.dot_dimension_numbers<[1], [0], [0], [1], [0, 0, 1, 1], [], []>} : vector<8x128xbf16>, vector<128x128xbf16>, vector<8x128xf32> -> vector<8x128xf32>
    %c6 = arith.constant 6 : index
    %c0_60 = arith.constant 0 : index
    %154 = vector.load %arg4[%c6, %c0_60] : memref<24x128xf32, #tpu.memory_space<vmem>>, vector<1x128xf32>
    %155 = vector.broadcast %154 : vector<1x128xf32> to vector<8x128xf32>
    %156 = arith.addf %153, %155 : vector<8x128xf32>
    %157 = vector.extract_strided_slice %156 {offsets = [0, 0], sizes = [8, 32], strides = [1, 1]} : vector<8x128xf32> to vector<8x32xf32>
    %158 = arith.addf %142, %157 : vector<8x32xf32>
    %c11 = arith.constant 11 : index
    %c0_61 = arith.constant 0 : index
    %159 = vector.load %arg4[%c11, %c0_61] : memref<24x128xf32, #tpu.memory_space<vmem>>, vector<1x32xf32>
    %c12 = arith.constant 12 : index
    %c0_62 = arith.constant 0 : index
    %160 = vector.load %arg4[%c12, %c0_62] : memref<24x128xf32, #tpu.memory_space<vmem>>, vector<1x32xf32>
    %cst_63 = arith.constant dense<0.000000e+00> : vector<8xf32>
    %161 = vector.multi_reduction <add>, %158, %cst_63 [1] : vector<8x32xf32> to vector<8xf32>
    %162 = vector.shape_cast %161 : vector<8xf32> to vector<8x1xf32>
    %cst_64 = arith.constant 3.200000e+01 : f32
    %163 = vector.broadcast %cst_64 : f32 to vector<8x1xf32>
    %164 = arith.divf %162, %163 : vector<8x1xf32>
    %165 = vector.broadcast %164 : vector<8x1xf32> to vector<8x32xf32>
    %166 = arith.subf %158, %165 : vector<8x32xf32>
    %167 = arith.mulf %166, %166 : vector<8x32xf32>
    %cst_65 = arith.constant dense<0.000000e+00> : vector<8xf32>
    %168 = vector.multi_reduction <add>, %167, %cst_65 [1] : vector<8x32xf32> to vector<8xf32>
    %169 = vector.shape_cast %168 : vector<8xf32> to vector<8x1xf32>
    %cst_66 = arith.constant 3.200000e+01 : f32
    %170 = vector.broadcast %cst_66 : f32 to vector<8x1xf32>
    %171 = arith.divf %169, %170 : vector<8x1xf32>
    %172 = vector.broadcast %164 : vector<8x1xf32> to vector<8x32xf32>
    %173 = arith.subf %158, %172 : vector<8x32xf32>
    %cst_67 = arith.constant 9.99999974E-6 : f32
    %174 = vector.broadcast %cst_67 : f32 to vector<8x1xf32>
    %175 = arith.addf %171, %174 : vector<8x1xf32>
    %176 = math.rsqrt %175 : vector<8x1xf32>
    %177 = vector.broadcast %176 : vector<8x1xf32> to vector<8x32xf32>
    %178 = arith.mulf %173, %177 : vector<8x32xf32>
    %179 = vector.broadcast %159 : vector<1x32xf32> to vector<8x32xf32>
    %180 = arith.mulf %178, %179 : vector<8x32xf32>
    %181 = vector.broadcast %160 : vector<1x32xf32> to vector<8x32xf32>
    %182 = arith.addf %180, %181 : vector<8x32xf32>
    %cst_68 = arith.constant 0.000000e+00 : f32
    %183 = vector.broadcast %cst_68 : f32 to vector<8x96xf32>
    %184 = tpu.concatenate %182, %183 in 1 : vector<8x32xf32>, vector<8x96xf32> -> vector<8x128xf32>
    %c0_69 = arith.constant 0 : index
    %c0_70 = arith.constant 0 : index
    %185 = vector.load %arg9[%c0_69, %c0_70] : memref<8x128xf32, #tpu.memory_space<vmem>>, vector<8x128xf32>
    tpu.vector_store %arg9[%c0_69, %c0_70], %184 {strides = array<i32>} : memref<8x128xf32, #tpu.memory_space<vmem>>, vector<8x128xf32>,
    return
  }
  func.func @transform_0(%arg0: i32) -> (i32, i32) {
    %c0_i32 = arith.constant 0 : i32
    %c0_i32_0 = arith.constant 0 : i32
    return %arg0, %c0_i32 : i32, i32
  }
  func.func @transform_1(%arg0: i32) -> (i32, i32) {
    %c0_i32 = arith.constant 0 : i32
    %c0_i32_0 = arith.constant 0 : i32
    return %arg0, %c0_i32 : i32, i32
  }
  func.func @transform_2(%arg0: i32) -> (i32, i32) {
    %c0_i32 = arith.constant 0 : i32
    %c0_i32_0 = arith.constant 0 : i32
    %c0_i32_1 = arith.constant 0 : i32
    return %c0_i32, %c0_i32_0 : i32, i32
  }
  func.func @transform_3(%arg0: i32) -> (i32, i32) {
    %c0_i32 = arith.constant 0 : i32
    %c0_i32_0 = arith.constant 0 : i32
    %c0_i32_1 = arith.constant 0 : i32
    return %c0_i32, %c0_i32_0 : i32, i32
  }
  func.func @transform_4(%arg0: i32) -> (i32, i32) {
    %c0_i32 = arith.constant 0 : i32
    %c0_i32_0 = arith.constant 0 : i32
    %c0_i32_1 = arith.constant 0 : i32
    return %c0_i32, %c0_i32_0 : i32, i32
  }
  func.func @transform_5(%arg0: i32) -> (i32, i32) {
    %c0_i32 = arith.constant 0 : i32
    %c0_i32_0 = arith.constant 0 : i32
    %c0_i32_1 = arith.constant 0 : i32
    return %c0_i32, %c0_i32_0 : i32, i32
  }
  func.func @transform_6(%arg0: i32) -> (i32, i32) {
    %c0_i32 = arith.constant 0 : i32
    %c0_i32_0 = arith.constant 0 : i32
    %c0_i32_1 = arith.constant 0 : i32
    return %c0_i32, %c0_i32_0 : i32, i32
  }
  func.func @transform_7(%arg0: i32) -> (i32, i32) {
    %c0_i32 = arith.constant 0 : i32
    %c0_i32_0 = arith.constant 0 : i32
    %c0_i32_1 = arith.constant 0 : i32
    return %c0_i32, %c0_i32_0 : i32, i32
  }
  func.func @transform_8(%arg0: i32) -> (i32, i32) {
    %c0_i32 = arith.constant 0 : i32
    %c0_i32_0 = arith.constant 0 : i32
    return %arg0, %c0_i32 : i32, i32
  }
}

</mosaic_0001>

<llo_original>
// kernel: tpu_custom_call.1
$region0: #{tpu_custom_call.1}
  #allocation0 [shape = 'u32[]', space=smem, size = 0x4, offset = 0x4, fixed_abs, tag = 'smem constant byte address 0x4 - core index']
  #allocation1 [shape = 'u32[144,128]{1,0:T(1,128)}', space=vmem, size = 0x12000, scoped, tag = 'internal scratch']
  %s0 = inlined_call_operand.hbm [shape: f32[16,32], index: 0, kind: input, shape index: {}]
  %s1 = inlined_call_operand.hbm [shape: f32[16,32], index: 1, kind: input, shape index: {}]
  %s2 = inlined_call_operand.hbm [shape: bf16[320,128], index: 2, kind: input, shape index: {}]
  %s3 = inlined_call_operand.hbm [shape: f32[24,128], index: 3, kind: input, shape index: {}]
  %s4 = inlined_call_operand.hbm [shape: bf16[32,128], index: 4, kind: input, shape index: {}]
  %s5 = inlined_call_operand.vmem [shape: f32[8,32], index: 5, kind: input, shape index: {}]
  %s6 = inlined_call_operand.hbm [shape: bf16[32,128], index: 6, kind: input, shape index: {}]
  %s7 = inlined_call_operand.hbm [shape: f32[8,32], index: 7, kind: input, shape index: {}]
  %s8 = inlined_call_operand.hbm [shape: f32[16,128], index: 8, kind: output, shape index: {}]
  %s9 = sld [smem:[#allocation0]]
  $region93: #{tpu_custom_call.1} parent=0
    _
  %s11 = ssub.s32 1, %s9
  %s12 = scalar_select 0, %s11, %s9
  $region1: #{tpu_custom_call.1} parent=0
    #allocation2 [shape = 'u8[8192]{0}', space=vmem, size = 0x2000, scoped, tag = 'input window, operand 0']
    #allocation3 [shape = 's32[2]{0}', space=sflag, size = 0x8, scoped, tag = 'scoped memory for tpu_custom_call.1']
    #allocation4 [shape = 's32[2]{0}', space=sflag, size = 0x8, scoped, tag = 'scoped memory for tpu_custom_call.1']
    #allocation5 [shape = 'u8[8192]{0}', space=vmem, size = 0x2000, scoped, tag = 'input window, operand 1']
    #allocation6 [shape = 's32[2]{0}', space=sflag, size = 0x8, scoped, tag = 'scoped memory for tpu_custom_call.1']
    #allocation7 [shape = 'u8[81920]{0}', space=vmem, size = 0x14000, scoped, tag = 'input window, operand 2, single buffered']
    #allocation8 [shape = 'u8[12288]{0}', space=vmem, size = 0x3000, scoped, tag = 'input window, operand 3, single buffered']
    #allocation9 [shape = 's32[1]{0}', space=sflag, size = 0x4, scoped, tag = 'scoped memory for tpu_custom_call.1']
    #allocation10 [shape = 'u8[8192]{0}', space=vmem, size = 0x2000, scoped, tag = 'input window, operand 4, single buffered']
    #allocation11 [shape = 'u8[8192]{0}', space=vmem, size = 0x2000, scoped, tag = 'input window, operand 6, single buffered']
    #allocation12 [shape = 's32[1]{0}', space=sflag, size = 0x4, scoped, tag = 'scoped memory for tpu_custom_call.1']
    #allocation13 [shape = 'u8[4096]{0}', space=vmem, size = 0x1000, scoped, tag = 'input window, operand 7, single buffered']
    #allocation14 [shape = 'u8[8192]{0}', space=vmem, size = 0x2000, scoped, tag = 'output window, operand 0']
    %13 = vsyncpa [#allocation3], 0
    %s14 = scalar_lea.sflag [#allocation3], 1
    %15 = vsyncpa %s14, 0
    %16 = vsyncpa [#allocation6], 0
    %s17 = scalar_lea.sflag [#allocation6], 1
    %18 = vsyncpa %s17, 0
    %19 = vsyncpa [#allocation9], 0
    %20 = vsyncpa [#allocation12], 0
    %21 = vsyncpa [#allocation4], 0
    %s22 = scalar_lea.sflag [#allocation4], 1
    %23 = vsyncpa %s22, 0
    loop: start=0, step=1, limit=4
    $region2: #{tpu_custom_call.1} parent=1 // loop_pre_header
      _
    $region3: #{tpu_custom_call.1} parent=1 // loop_header
      %s25 = sphi 0, %s29
      %p26 = scmp.ge.s32.totalorder %s25, 4
      %s35 = sphi 0, %s37
      %s38 = sphi 0, %s35
      %s39 = sphi 0, %s38
      %s55 = sphi 0, %s39
      %s61 = sphi 0, %s63
      %s64 = sphi 0, %s61
      %s65 = sphi 0, %s64
      %s81 = sphi 0, %s65
      %s85 = sphi 0, %s85
      %s87 = sphi 0, %s85
      %s88 = sphi 0, %s87
      %s102 = sphi 0, %s88
      %s106 = sphi 0, %s106
      %s108 = sphi 0, %s106
      %s109 = sphi 0, %s108
      %s123 = sphi 0, %s109
      %s127 = sphi 0, %s127
      %s129 = sphi 0, %s127
      %s130 = sphi 0, %s129
      %s144 = sphi 0, %s130
      %s148 = sphi 0, %s148
      %s150 = sphi 0, %s148
      %s151 = sphi 0, %s150
      %s165 = sphi 0, %s151
      %s169 = sphi 0, %s169
      %s171 = sphi 0, %s169
      %s172 = sphi 0, %s171
      %s186 = sphi 0, %s172
      %s190 = sphi 0, %s190
      %s192 = sphi 0, %s190
      %s193 = sphi 0, %s192
      %s207 = sphi 0, %s193
      %s213 = sphi 0, %s215
      %s216 = sphi 0, %s213
      %s217 = sphi 0, %s216
      %s233 = sphi 0, %s217
    $region4: #{tpu_custom_call.1} parent=1 // loop_header_branch
      %28 = sbr.rel (%p26) target = $region8
    $region5: #{tpu_custom_call.1} parent=1 // loop_body
      %s30 = ssub.s32 %s25, 1
      %s31 = ssub.s32 %s25, 2
      %s32 = sadd.s32 %s25, 1
      %s33 = ssub.s32 %s25, %s32
      %p34 = scmp.eq.s32.totalorder %s33, 0
      %s36 = sadd.s32 %s35, 1
      %s37 = scalar_select %p34, %s35, %s36
      %p40 = pneg %p34
      %p41 = scmp.eq.s32.totalorder %s25, 1
      %p42 = por %p40, %p41
      %p43 = scmp.ne.s32.totalorder %s35, %s38
      %p44 = scmp.eq.s32.totalorder %s25, 0
      %p45 = por %p43, %p44
      %p46 = scmp.ne.s32.totalorder %s35, %s38
      %p47 = scmp.eq.s32.totalorder %s30, 1
      %p48 = por %p46, %p47
      %p49 = scmp.ne.s32.totalorder %s38, %s39
      %p50 = scmp.eq.s32.totalorder %s30, 0
      %p51 = por %p49, %p50
      %p52 = scmp.ne.s32.totalorder %s38, %s39
      %p53 = scmp.eq.s32.totalorder %s31, 1
      %p54 = por %p52, %p53
      %p56 = scmp.ne.s32.totalorder %s39, %s55
      %p57 = scmp.eq.s32.totalorder %s31, 0
      %p58 = por %p56, %p57
      %s59 = ssub.s32 %s25, %s32
      %p60 = scmp.eq.s32.totalorder %s59, 0
      %s62 = sadd.s32 %s61, 1
      %s63 = scalar_select %p60, %s61, %s62
      %p66 = pneg %p60
      %p67 = scmp.eq.s32.totalorder %s25, 1
      %p68 = por %p66, %p67
      %p69 = scmp.ne.s32.totalorder %s61, %s64
      %p70 = scmp.eq.s32.totalorder %s25, 0
      %p71 = por %p69, %p70
      %p72 = scmp.ne.s32.totalorder %s61, %s64
      %p73 = scmp.eq.s32.totalorder %s30, 1
      %p74 = por %p72, %p73
      %p75 = scmp.ne.s32.totalorder %s64, %s65
      %p76 = scmp.eq.s32.totalorder %s30, 0
      %p77 = por %p75, %p76
      %p78 = scmp.ne.s32.totalorder %s64, %s65
      %p79 = scmp.eq.s32.totalorder %s31, 1
      %p80 = por %p78, %p79
      %p82 = scmp.ne.s32.totalorder %s65, %s81
      %p83 = scmp.eq.s32.totalorder %s31, 0
      %p84 = por %p82, %p83
      %s86 = sadd.s32 %s85, 1
      %p89 = scmp.eq.s32.totalorder %s25, 1
      %p90 = scmp.ne.s32.totalorder %s85, %s87
      %p91 = scmp.eq.s32.totalorder %s25, 0
      %p92 = por %p90, %p91
      %p93 = scmp.ne.s32.totalorder %s85, %s87
      %p94 = scmp.eq.s32.totalorder %s30, 1
      %p95 = por %p93, %p94
      %p96 = scmp.ne.s32.totalorder %s87, %s88
      %p97 = scmp.eq.s32.totalorder %s30, 0
      %p98 = por %p96, %p97
      %p99 = scmp.ne.s32.totalorder %s87, %s88
      %p100 = scmp.eq.s32.totalorder %s31, 1
      %p101 = por %p99, %p100
      %p103 = scmp.ne.s32.totalorder %s88, %s102
      %p104 = scmp.eq.s32.totalorder %s31, 0
      %p105 = por %p103, %p104
      %s107 = sadd.s32 %s106, 1
      %p110 = scmp.eq.s32.totalorder %s25, 1
      %p111 = scmp.ne.s32.totalorder %s106, %s108
      %p112 = scmp.eq.s32.totalorder %s25, 0
      %p113 = por %p111, %p112
      %p114 = scmp.ne.s32.totalorder %s106, %s108
      %p115 = scmp.eq.s32.totalorder %s30, 1
      %p116 = por %p114, %p115
      %p117 = scmp.ne.s32.totalorder %s108, %s109
      %p118 = scmp.eq.s32.totalorder %s30, 0
      %p119 = por %p117, %p118
      %p120 = scmp.ne.s32.totalorder %s108, %s109
      %p121 = scmp.eq.s32.totalorder %s31, 1
      %p122 = por %p120, %p121
      %p124 = scmp.ne.s32.totalorder %s109, %s123
      %p125 = scmp.eq.s32.totalorder %s31, 0
      %p126 = por %p124, %p125
      %s128 = sadd.s32 %s127, 1
      %p131 = scmp.eq.s32.totalorder %s25, 1
      %p132 = scmp.ne.s32.totalorder %s127, %s129
      %p133 = scmp.eq.s32.totalorder %s25, 0
      %p134 = por %p132, %p133
      %p135 = scmp.ne.s32.totalorder %s127, %s129
      %p136 = scmp.eq.s32.totalorder %s30, 1
      %p137 = por %p135, %p136
      %p138 = scmp.ne.s32.totalorder %s129, %s130
      %p139 = scmp.eq.s32.totalorder %s30, 0
      %p140 = por %p138, %p139
      %p141 = scmp.ne.s32.totalorder %s129, %s130
      %p142 = scmp.eq.s32.totalorder %s31, 1
      %p143 = por %p141, %p142
      %p145 = scmp.ne.s32.totalorder %s130, %s144
      %p146 = scmp.eq.s32.totalorder %s31, 0
      %p147 = por %p145, %p146
      %s149 = sadd.s32 %s148, 1
      %p152 = scmp.eq.s32.totalorder %s25, 1
      %p153 = scmp.ne.s32.totalorder %s148, %s150
      %p154 = scmp.eq.s32.totalorder %s25, 0
      %p155 = por %p153, %p154
      %p156 = scmp.ne.s32.totalorder %s148, %s150
      %p157 = scmp.eq.s32.totalorder %s30, 1
      %p158 = por %p156, %p157
      %p159 = scmp.ne.s32.totalorder %s150, %s151
      %p160 = scmp.eq.s32.totalorder %s30, 0
      %p161 = por %p159, %p160
      %p162 = scmp.ne.s32.totalorder %s150, %s151
      %p163 = scmp.eq.s32.totalorder %s31, 1
      %p164 = por %p162, %p163
      %p166 = scmp.ne.s32.totalorder %s151, %s165
      %p167 = scmp.eq.s32.totalorder %s31, 0
      %p168 = por %p166, %p167
      %s170 = sadd.s32 %s169, 1
      %p173 = scmp.eq.s32.totalorder %s25, 1
      %p174 = scmp.ne.s32.totalorder %s169, %s171
      %p175 = scmp.eq.s32.totalorder %s25, 0
      %p176 = por %p174, %p175
      %p177 = scmp.ne.s32.totalorder %s169, %s171
      %p178 = scmp.eq.s32.totalorder %s30, 1
      %p179 = por %p177, %p178
      %p180 = scmp.ne.s32.totalorder %s171, %s172
      %p181 = scmp.eq.s32.totalorder %s30, 0
      %p182 = por %p180, %p181
      %p183 = scmp.ne.s32.totalorder %s171, %s172
      %p184 = scmp.eq.s32.totalorder %s31, 1
      %p185 = por %p183, %p184
      %p187 = scmp.ne.s32.totalorder %s172, %s186
      %p188 = scmp.eq.s32.totalorder %s31, 0
      %p189 = por %p187, %p188
      %s191 = sadd.s32 %s190, 1
      %p194 = scmp.eq.s32.totalorder %s25, 1
      %p195 = scmp.ne.s32.totalorder %s190, %s192
      %p196 = scmp.eq.s32.totalorder %s25, 0
      %p197 = por %p195, %p196
      %p198 = scmp.ne.s32.totalorder %s190, %s192
      %p199 = scmp.eq.s32.totalorder %s30, 1
      %p200 = por %p198, %p199
      %p201 = scmp.ne.s32.totalorder %s192, %s193
      %p202 = scmp.eq.s32.totalorder %s30, 0
      %p203 = por %p201, %p202
      %p204 = scmp.ne.s32.totalorder %s192, %s193
      %p205 = scmp.eq.s32.totalorder %s31, 1
      %p206 = por %p204, %p205
      %p208 = scmp.ne.s32.totalorder %s193, %s207
      %p209 = scmp.eq.s32.totalorder %s31, 0
      %p210 = por %p208, %p209
      %s211 = ssub.s32 %s25, %s32
      %p212 = scmp.eq.s32.totalorder %s211, 0
      %s214 = sadd.s32 %s213, 1
      %s215 = scalar_select %p212, %s213, %s214
      %p218 = pneg %p212
      %p219 = scmp.eq.s32.totalorder %s25, 1
      %p220 = por %p218, %p219
      %p221 = scmp.ne.s32.totalorder %s213, %s216
      %p222 = scmp.eq.s32.totalorder %s25, 0
      %p223 = por %p221, %p222
      %p224 = scmp.ne.s32.totalorder %s213, %s216
      %p225 = scmp.eq.s32.totalorder %s30, 1
      %p226 = por %p224, %p225
      %p227 = scmp.ne.s32.totalorder %s216, %s217
      %p228 = scmp.eq.s32.totalorder %s30, 0
      %p229 = por %p227, %p228
      %p230 = scmp.ne.s32.totalorder %s216, %s217
      %p231 = scmp.eq.s32.totalorder %s31, 1
      %p232 = por %p230, %p231
      %p234 = scmp.ne.s32.totalorder %s217, %s233
      %p235 = scmp.eq.s32.totalorder %s31, 0
      %p236 = por %p234, %p235
      %p237 = scmp.le.s32.totalorder 1, %s25
      %p238 = scmp.lt.s32.totalorder %s25, 3
      %p239 = pnand %p237, %p238
      %p240 = pneg %p239
      // Predicated region
      $region9: #{tpu_custom_call.1} parent=5 // pred_check
        _
      $region10: #{tpu_custom_call.1} parent=5 // pred_check_branch
        %242 = sbr.rel (%p239) target = $region12
      $region11: #{tpu_custom_call.1} parent=5 // pred_region
        %s243 = ssub.s32 %s25, 1
        // Predicated region
        $region13: #{tpu_custom_call.1} parent=11 // pred_check
          %p244 = pneg %p98
        $region14: #{tpu_custom_call.1} parent=11 // pred_check_branch
          %246 = sbr.rel (%p244) target = $region16
        $region15: #{tpu_custom_call.1} parent=11 // pred_region
          %s248 = ssub.s32 2560, 2560
          %249 = vsyncadd [#allocation6], %s248
          %s250 = sshll.u32 [#allocation7], 4
          %s251 = int_to_ptr.vmem [resolvable:$true] %s250
          %256 = dma.hbm_to_vmem [thread:$0]  %s2, 2560, %s251, [#allocation6], 64, 64, 4
        $region16: #{tpu_custom_call.1} parent=11 // pred_fallthru
          _
        // Predicated region
        $region17: #{tpu_custom_call.1} parent=11 // pred_check
          %p257 = pneg %p119
        $region18: #{tpu_custom_call.1} parent=11 // pred_check_branch
          %259 = sbr.rel (%p257) target = $region20
        $region19: #{tpu_custom_call.1} parent=11 // pred_region
          %s261 = ssub.s32 384, 384
          %262 = vsyncadd [#allocation9], %s261
          %s263 = sshll.u32 [#allocation8], 4
          %s264 = int_to_ptr.vmem [resolvable:$true] %s263
          %269 = dma.hbm_to_vmem [thread:$0]  %s3, 384, %s264, [#allocation9], 128, 128, 8
        $region20: #{tpu_custom_call.1} parent=11 // pred_fallthru
          _
        // Predicated region
        $region21: #{tpu_custom_call.1} parent=11 // pred_check
          %p270 = pneg %p140
        $region22: #{tpu_custom_call.1} parent=11 // pred_check_branch
          %272 = sbr.rel (%p270) target = $region24
        $region23: #{tpu_custom_call.1} parent=11 // pred_region
          %s274 = ssub.s32 256, 256
          %275 = vsyncadd [#allocation9], %s274
          %s276 = sshll.u32 [#allocation10], 4
          %s277 = int_to_ptr.vmem [resolvable:$true] %s276
          %282 = dma.hbm_to_vmem [thread:$0]  %s4, 256, %s277, [#allocation9], 64, 64, 4
        $region24: #{tpu_custom_call.1} parent=11 // pred_fallthru
          _
        // Predicated region
        $region25: #{tpu_custom_call.1} parent=11 // pred_check
          %p283 = pneg %p161
        $region26: #{tpu_custom_call.1} parent=11 // pred_check_branch
          %285 = sbr.rel (%p283) target = $region28
        $region27: #{tpu_custom_call.1} parent=11 // pred_region
          _
        $region28: #{tpu_custom_call.1} parent=11 // pred_fallthru
          _
        // Predicated region
        $region29: #{tpu_custom_call.1} parent=11 // pred_check
          %p286 = pneg %p182
        $region30: #{tpu_custom_call.1} parent=11 // pred_check_branch
          %288 = sbr.rel (%p286) target = $region32
        $region31: #{tpu_custom_call.1} parent=11 // pred_region
          %s290 = ssub.s32 256, 256
          %291 = vsyncadd [#allocation12], %s290
          %s292 = sshll.u32 [#allocation11], 4
          %s293 = int_to_ptr.vmem [resolvable:$true] %s292
          %298 = dma.hbm_to_vmem [thread:$0]  %s6, 256, %s293, [#allocation12], 64, 64, 4
        $region32: #{tpu_custom_call.1} parent=11 // pred_fallthru
          _
        // Predicated region
        $region33: #{tpu_custom_call.1} parent=11 // pred_check
          %p299 = pneg %p203
        $region34: #{tpu_custom_call.1} parent=11 // pred_check_branch
          %301 = sbr.rel (%p299) target = $region36
        $region35: #{tpu_custom_call.1} parent=11 // pred_region
          %s303 = ssub.s32 128, 128
          %304 = vsyncadd [#allocation12], %s303
          %s306 = sshll.u32 [#allocation13], 4
          %s307 = int_to_ptr.vmem [resolvable:$true] %s306
          %309 = dma.hbm_to_vmem [thread:$0]  %s7, 128, %s307, [#allocation12]
        $region36: #{tpu_custom_call.1} parent=11 // pred_fallthru
          _
      $region12: #{tpu_custom_call.1} parent=5 // pred_fallthru
        _
      %p310 = scmp.lt.s32.totalorder %s25, 2
      // Predicated region
      $region37: #{tpu_custom_call.1} parent=5 // pred_check
        %p311 = pneg %p310
      $region38: #{tpu_custom_call.1} parent=5 // pred_check_branch
        %313 = sbr.rel (%p311) target = $region40
      $region39: #{tpu_custom_call.1} parent=5 // pred_region
        // Predicated region
        $region41: #{tpu_custom_call.1} parent=39 // pred_check
          %p314 = pneg %p45
        $region42: #{tpu_custom_call.1} parent=39 // pred_check_branch
          %316 = sbr.rel (%p314) target = $region44
        $region43: #{tpu_custom_call.1} parent=39 // pred_region
          %s317 = sand.u32 %s35, 1
          %s318 = scalar_lea.sflag [#allocation3], %s317
          %s319 = sand.u32 %s35, 1
          %s320 = smul.addr %s319, 8
          %s321 = scalar_lea.vmem [#allocation2], %s320
          %s323 = ssub.s32 128, 128
          %324 = vsyncadd %s318, %s323
          %s325 = smul.addr %s25, 128
          %s326 = scalar_lea.hbm %s0, %s325
          %s328 = sshll.u32 %s321, 4
          %s329 = int_to_ptr.vmem [resolvable:$true] %s328
          %331 = dma.hbm_to_vmem [thread:$0]  %s326, 128, %s329, %s318
        $region44: #{tpu_custom_call.1} parent=39 // pred_fallthru
          _
        // Predicated region
        $region45: #{tpu_custom_call.1} parent=39 // pred_check
          %p332 = pneg %p71
        $region46: #{tpu_custom_call.1} parent=39 // pred_check_branch
          %334 = sbr.rel (%p332) target = $region48
        $region47: #{tpu_custom_call.1} parent=39 // pred_region
          %s335 = sand.u32 %s25, 1
          %s336 = scalar_lea.sflag [#allocation6], %s335
          %s337 = sand.u32 %s61, 1
          %s338 = smul.addr %s337, 8
          %s339 = scalar_lea.vmem [#allocation5], %s338
          %s341 = ssub.s32 128, 128
          %342 = vsyncadd %s336, %s341
          %s343 = smul.addr %s25, 128
          %s344 = scalar_lea.hbm %s1, %s343
          %s346 = sshll.u32 %s339, 4
          %s347 = int_to_ptr.vmem [resolvable:$true] %s346
          %349 = dma.hbm_to_vmem [thread:$0]  %s344, 128, %s347, %s336
        $region48: #{tpu_custom_call.1} parent=39 // pred_fallthru
          _
      $region40: #{tpu_custom_call.1} parent=5 // pred_fallthru
        _
      %p350 = scmp.le.s32.totalorder 1, %s25
      %p351 = scmp.lt.s32.totalorder %s25, 3
      %p352 = pnand %p350, %p351
      %p353 = pneg %p352
      // Predicated region
      $region49: #{tpu_custom_call.1} parent=5 // pred_check
        _
      $region50: #{tpu_custom_call.1} parent=5 // pred_check_branch
        %355 = sbr.rel (%p352) target = $region52
      $region51: #{tpu_custom_call.1} parent=5 // pred_region
        %s356 = ssub.s32 %s25, 1
        %s357 = sand.u32 %s38, 1
        %s358 = scalar_lea.sflag [#allocation3], %s357
        %s359 = sand.u32 %s38, 1
        %s360 = smul.addr %s359, 8
        %s361 = scalar_lea.vmem [#allocation2], %s360
        // Predicated region
        $region53: #{tpu_custom_call.1} parent=51 // pred_check
          %p362 = pneg %p51
        $region54: #{tpu_custom_call.1} parent=51 // pred_check_branch
          %364 = sbr.rel (%p362) target = $region56
        $region55: #{tpu_custom_call.1} parent=51 // pred_region
          %365 = dma.done %s358, 128
        $region56: #{tpu_custom_call.1} parent=51 // pred_fallthru
          _
        %s366 = sand.u32 %s30, 1
        %s367 = scalar_lea.sflag [#allocation6], %s366
        %s368 = sand.u32 %s64, 1
        %s369 = smul.addr %s368, 8
        %s370 = scalar_lea.vmem [#allocation5], %s369
        // Predicated region
        $region57: #{tpu_custom_call.1} parent=51 // pred_check
          %p371 = pneg %p77
        $region58: #{tpu_custom_call.1} parent=51 // pred_check_branch
          %373 = sbr.rel (%p371) target = $region60
        $region59: #{tpu_custom_call.1} parent=51 // pred_region
          %374 = dma.done %s367, 128
        $region60: #{tpu_custom_call.1} parent=51 // pred_fallthru
          _
        // Predicated region
        $region61: #{tpu_custom_call.1} parent=51 // pred_check
          %p375 = pneg %p98
        $region62: #{tpu_custom_call.1} parent=51 // pred_check_branch
          %377 = sbr.rel (%p375) target = $region64
        $region63: #{tpu_custom_call.1} parent=51 // pred_region
          %378 = dma.done [#allocation6], 2560
        $region64: #{tpu_custom_call.1} parent=51 // pred_fallthru
          _
        // Predicated region
        $region65: #{tpu_custom_call.1} parent=51 // pred_check
          %p379 = pneg %p119
        $region66: #{tpu_custom_call.1} parent=51 // pred_check_branch
          %381 = sbr.rel (%p379) target = $region68
        $region67: #{tpu_custom_call.1} parent=51 // pred_region
          %382 = dma.done [#allocation9], 384
        $region68: #{tpu_custom_call.1} parent=51 // pred_fallthru
          _
        // Predicated region
        $region69: #{tpu_custom_call.1} parent=51 // pred_check
          %p383 = pneg %p140
        $region70: #{tpu_custom_call.1} parent=51 // pred_check_branch
          %385 = sbr.rel (%p383) target = $region72
        $region71: #{tpu_custom_call.1} parent=51 // pred_region
          %386 = dma.done [#allocation9], 256
        $region72: #{tpu_custom_call.1} parent=51 // pred_fallthru
          _
        // Predicated region
        $region73: #{tpu_custom_call.1} parent=51 // pred_check
          %p387 = pneg %p182
        $region74: #{tpu_custom_call.1} parent=51 // pred_check_branch
          %389 = sbr.rel (%p387) target = $region76
        $region75: #{tpu_custom_call.1} parent=51 // pred_region
          %390 = dma.done [#allocation12], 256
        $region76: #{tpu_custom_call.1} parent=51 // pred_fallthru
          _
        // Predicated region
        $region77: #{tpu_custom_call.1} parent=51 // pred_check
          %p391 = pneg %p203
        $region78: #{tpu_custom_call.1} parent=51 // pred_check_branch
          %393 = sbr.rel (%p391) target = $region80
        $region79: #{tpu_custom_call.1} parent=51 // pred_region
          %394 = dma.done [#allocation12], 128
        $region80: #{tpu_custom_call.1} parent=51 // pred_fallthru
          _
        %s395 = sand.u32 %s38, 1
        %s396 = scalar_lea.sflag [#allocation3], %s395
        %s397 = sand.u32 %s38, 1
        %s398 = smul.addr %s397, 8
        %s399 = scalar_lea.vmem [#allocation2], %s398
        %p400 = pneg %p51
        %p401 = pneg %p48
        %s402 = sand.u32 %s30, 1
        %s403 = scalar_lea.sflag [#allocation6], %s402
        %s404 = sand.u32 %s64, 1
        %s405 = smul.addr %s404, 8
        %s406 = scalar_lea.vmem [#allocation5], %s405
        %p407 = pneg %p77
        %p408 = pneg %p74
        %p409 = pneg %p98
        %p410 = pneg %p95
        %p411 = pneg %p119
        %p412 = pneg %p116
        %p413 = pneg %p140
        %p414 = pneg %p137
        %p415 = pneg %p161
        %p416 = pneg %p158
        %p417 = pneg %p182
        %p418 = pneg %p179
        %p419 = pneg %p203
        %p420 = pneg %p200
        %p421 = pneg %p229
        %p422 = pneg %p226
        %s423 = sand.u32 %s216, 1
        %s424 = scalar_lea.sflag [#allocation4], %s423
        %s425 = sand.u32 %s216, 1
        %s426 = smul.addr %s425, 8
        %s427 = scalar_lea.vmem [#allocation14], %s426
        %v429 = vld [vmem:[#allocation8 + $0xd] sm:$0xf]
        %v430 = vld [vmem:[%s361] sm:$0xff]
        %v431 = vld [vmem:[%s370] sm:$0xff]
        %v432 = vpack.c.bf16 %v430, %v430
        %v433 = vld [vmem:[#allocation7] sm:$0xf]
        %v434 = vld [vmem:[#allocation7 + $0x4] sm:$0xf]
        %v435 = vld [vmem:[#allocation7 + $0x8] sm:$0xf]
        %v436 = vld [vmem:[#allocation7 + $0xc] sm:$0xf]
        %v437 = vld [vmem:[#allocation8] sm:$0x1]
        %v438 = vlaneseq
        %v439 = vshrl.u32 %v438, 7
        %v440 = vsub.s32 0, %v439
        %v441 = vrot.slane %v437, %v440
        %v446 = vunpack.c.l.b16 %v433
        %v447 = vunpack.c.l.b16 %v434
        %v448 = vunpack.c.l.b16 %v435
        %v449 = vunpack.c.l.b16 %v436
        %v450 = vpack.c.b16 %v447, %v446
        %v451 = vpack.c.b16 %v449, %v448
        %vm454 = vcmask 261120
        %v456 = vsel %vm454, %v432, 0
        %458 = vmatprep.subr.bf16.mxu0 0
        %459 = vmatpush1.bf16.msra.mxu0 0
        %460 = vmatprep.subr.bf16.mxu0 0
        %461 = vmatpush1.bf16.msra.mxu0 0
        %462 = vmatprep.subr.bf16.mxu0 0
        %463 = vmatpush1.bf16.msra.mxu0 0
        %464 = vmatprep.subr.bf16.mxu0 0
        %465 = vmatpush1.bf16.msra.mxu0 0
        %466 = vmatprep.subr.bf16.mxu0 0
        %467 = vmatpush1.bf16.msra.mxu0 0
        %468 = vmatprep.subr.bf16.mxu0 0
        %469 = vmatpush1.bf16.msra.mxu0 0
        %470 = vmatprep.subr.bf16.mxu0 0
        %471 = vmatpush1.bf16.msra.mxu0 %v451
        %472 = vmatprep.subr.bf16.mxu0 0
        %473 = vmatpush1.bf16.msra.mxu0 %v450
        %474 = vmatprep.subr.bf16.mxu0 0
        %475 = vmatpush2.bf16.msra.mxu0 0
        %476 = vmatprep.subr.bf16.mxu0 0
        %477 = vmatpush2.bf16.msra.mxu0 0
        %478 = vmatprep.subr.bf16.mxu0 0
        %479 = vmatpush2.bf16.msra.mxu0 0
        %480 = vmatprep.subr.bf16.mxu0 0
        %481 = vmatpush2.bf16.msra.mxu0 0
        %482 = vmatprep.subr.bf16.mxu0 0
        %483 = vmatpush2.bf16.msra.mxu0 0
        %484 = vmatprep.subr.bf16.mxu0 0
        %485 = vmatpush2.bf16.msra.mxu0 0
        %486 = vmatprep.subr.bf16.mxu0 0
        %487 = vmatpush2.bf16.msra.mxu0 0
        %488 = vmatprep.subr.bf16.mxu0 0
        %489 = vmatpush2.bf16.msra.mxu0 0
        %490 = vmatprep.mubr.bf16.mxu0 0
        %491 = vmatmul.mubr.bf16.gmra.mxu0 %v456
        %v492 = vpop.f32.mrf.mxu0
        %v493 = vadd.f32 %v441, %v492
        %v494 = vpop.f32.mrf.mxu0
        %v495 = vpop.f32.mrf.mxu0
        %v496 = vpop.f32.mrf.mxu0
        %497 = vdwg.mxu0
        %v498 = vld [vmem:[#allocation10] sm:$0xf]
        %v499 = vld [vmem:[#allocation10 + $0x4] sm:$0xf]
        %v500 = vld [vmem:[#allocation10 + $0x8] sm:$0xf]
        %v501 = vld [vmem:[#allocation10 + $0xc] sm:$0xf]
        %v502 = vld [vmem:[%s5] sm:$0xff]
        %v503 = vpack.c.bf16 %v493, %v493
        %v505 = vrot.slane %v503, 4
        %vm506 = vcmask 1043456
        %v509 = vsel %vm506, %v503, %v505
        %v515 = vunpack.c.l.b16 %v498
        %v516 = vunpack.c.l.b16 %v499
        %v517 = vunpack.c.l.b16 %v500
        %v518 = vunpack.c.l.b16 %v501
        %v519 = vpack.c.b16 %v516, %v515
        %v520 = vpack.c.b16 %v518, %v517
        %521 = vrot.lane.b32.xlu0 %v519, 32
        %v522 = vpop.permute.xlu0 %521
        %523 = vrot.lane.b32.xlu0 %v520, 32
        %v524 = vpop.permute.xlu0 %523
        %v527 = vmul.bf16 %v509, %v522
        %v528 = vmul.bf16 %v509, %v524
        %529 = vrot.lane.b32.xlu0 %v519, 64
        %v530 = vpop.permute.xlu0 %529
        %531 = vrot.lane.b32.xlu0 %v520, 64
        %v532 = vpop.permute.xlu0 %531
        %v535 = vmul.bf16 %v509, %v530
        %v536 = vmul.bf16 %v509, %v532
        %539 = vrot.lane.b32.xlu0 %v527, 96
        %v540 = vpop.permute.xlu0 %539
        %541 = vrot.lane.b32.xlu0 %v528, 96
        %v542 = vpop.permute.xlu0 %541
        %v543 = vsel %vm454, %v503, 0
        %v546 = vsel %vm454, %v540, 0
        %v549 = vsel %vm454, %v542, 0
        %551 = vmatprep.subr.bf16.mxu0 0
        %552 = vmatpush1.bf16.xpose.msra.mxu0 0
        %553 = vmatprep.subr.bf16.mxu0 0
        %554 = vmatpush1.bf16.xpose.msra.mxu0 0
        %555 = vmatprep.subr.bf16.mxu0 0
        %556 = vmatpush1.bf16.xpose.msra.mxu0 0
        %557 = vmatprep.subr.bf16.mxu0 0
        %558 = vmatpush1.bf16.xpose.msra.mxu0 0
        %559 = vmatprep.subr.bf16.mxu0 0
        %560 = vmatpush1.bf16.xpose.msra.mxu0 0
        %561 = vmatprep.subr.bf16.mxu0 0
        %562 = vmatpush1.bf16.xpose.msra.mxu0 0
        %563 = vmatprep.subr.bf16.mxu0 0
        %564 = vmatpush1.bf16.xpose.msra.mxu0 %v549
        %565 = vmatprep.subr.bf16.mxu0 0
        %566 = vmatpush1.bf16.xpose.msra.mxu0 %v546
        %567 = vmatprep.subr.bf16.mxu0 0
        %568 = vmatpush2.bf16.xpose.msra.mxu0 0
        %569 = vmatprep.subr.bf16.mxu0 0
        %570 = vmatpush2.bf16.xpose.msra.mxu0 0
        %571 = vmatprep.subr.bf16.mxu0 0
        %572 = vmatpush2.bf16.xpose.msra.mxu0 0
        %573 = vmatprep.subr.bf16.mxu0 0
        %574 = vmatpush2.bf16.xpose.msra.mxu0 0
        %575 = vmatprep.subr.bf16.mxu0 0
        %576 = vmatpush2.bf16.xpose.msra.mxu0 0
        %577 = vmatprep.subr.bf16.mxu0 0
        %578 = vmatpush2.bf16.xpose.msra.mxu0 0
        %579 = vmatprep.subr.bf16.mxu0 0
        %580 = vmatpush2.bf16.xpose.msra.mxu0 0
        %581 = vmatprep.subr.bf16.mxu0 0
        %582 = vmatpush2.bf16.xpose.msra.mxu0 0
        %583 = vmatprep.mubr.bf16.mxu0 0
        %584 = vmatmul.mubr.bf16.gmra.mxu0 %v543
        %v585 = vpop.f32.mrf.mxu0
        %v586 = vadd.f32 0.0, %v585
        %v587 = vpop.f32.mrf.mxu0
        %v588 = vpop.f32.mrf.mxu0
        %v589 = vpop.f32.mrf.mxu0
        %590 = vdwg.mxu0
        %v591 = vmul.f32 %v586, 0.35355338
        %v592 = vadd.f32 %v591, %v502
        %v593 = vsel %vm454, %v592, -inf
        %594 = vmax.xlane.f32.xlu0 %v593
        %v595 = vpop.xlane.xlu0 %594
        %v596 = vsub.f32 %v592, %v595
        %v597 = vmul.f32 %v596, 1.442695
        %v598 = vpow.pop %v597
        %v599 = vpack.c.bf16 %v598, %v598
        %600 = vrot.lane.b32.xlu0 %v519, 96
        %v601 = vpop.permute.xlu0 %600
        %602 = vrot.lane.b32.xlu0 %v520, 96
        %v603 = vpop.permute.xlu0 %602
        %v607 = vsel %vm454, %v599, 0
        %609 = vmatprep.subr.bf16.mxu0 0
        %610 = vmatpush1.bf16.msra.mxu0 0
        %611 = vmatprep.subr.bf16.mxu0 0
        %612 = vmatpush1.bf16.msra.mxu0 0
        %613 = vmatprep.subr.bf16.mxu0 0
        %614 = vmatpush1.bf16.msra.mxu0 0
        %615 = vmatprep.subr.bf16.mxu0 0
        %616 = vmatpush1.bf16.msra.mxu0 0
        %617 = vmatprep.subr.bf16.mxu0 0
        %618 = vmatpush1.bf16.msra.mxu0 0
        %619 = vmatprep.subr.bf16.mxu0 0
        %620 = vmatpush1.bf16.msra.mxu0 0
        %621 = vmatprep.subr.bf16.mxu0 0
        %622 = vmatpush1.bf16.msra.mxu0 %v603
        %623 = vmatprep.subr.bf16.mxu0 0
        %624 = vmatpush1.bf16.msra.mxu0 %v601
        %625 = vmatprep.subr.bf16.mxu0 0
        %626 = vmatpush2.bf16.msra.mxu0 0
        %627 = vmatprep.subr.bf16.mxu0 0
        %628 = vmatpush2.bf16.msra.mxu0 0
        %629 = vmatprep.subr.bf16.mxu0 0
        %630 = vmatpush2.bf16.msra.mxu0 0
        %631 = vmatprep.subr.bf16.mxu0 0
        %632 = vmatpush2.bf16.msra.mxu0 0
        %633 = vmatprep.subr.bf16.mxu0 0
        %634 = vmatpush2.bf16.msra.mxu0 0
        %635 = vmatprep.subr.bf16.mxu0 0
        %636 = vmatpush2.bf16.msra.mxu0 0
        %637 = vmatprep.subr.bf16.mxu0 0
        %638 = vmatpush2.bf16.msra.mxu0 0
        %639 = vmatprep.subr.bf16.mxu0 0
        %640 = vmatpush2.bf16.msra.mxu0 0
        %641 = vmatprep.mubr.bf16.mxu0 0
        %642 = vmatmul.mubr.bf16.gmra.mxu0 %v607
        %v643 = vpop.f32.mrf.mxu0
        %v644 = vadd.f32 0.0, %v643
        %v645 = vpop.f32.mrf.mxu0
        %v646 = vpop.f32.mrf.mxu0
        %v647 = vpop.f32.mrf.mxu0
        %648 = vdwg.mxu0
        %651 = vrot.lane.b32.xlu0 %v535, 64
        %v652 = vpop.permute.xlu0 %651
        %653 = vrot.lane.b32.xlu0 %v536, 64
        %v654 = vpop.permute.xlu0 %653
        %657 = vmatprep.subr.bf16.mxu0 0
        %658 = vmatpush1.bf16.msra.mxu0 0
        %659 = vmatprep.subr.bf16.mxu0 0
        %660 = vmatpush1.bf16.msra.mxu0 0
        %661 = vmatprep.subr.bf16.mxu0 0
        %662 = vmatpush1.bf16.msra.mxu0 0
        %663 = vmatprep.subr.bf16.mxu0 0
        %664 = vmatpush1.bf16.msra.mxu0 0
        %665 = vmatprep.subr.bf16.mxu0 0
        %666 = vmatpush1.bf16.msra.mxu0 0
        %667 = vmatprep.subr.bf16.mxu0 0
        %668 = vmatpush1.bf16.msra.mxu0 0
        %669 = vmatprep.subr.bf16.mxu0 0
        %670 = vmatpush1.bf16.msra.mxu0 %v654
        %671 = vmatprep.subr.bf16.mxu0 0
        %672 = vmatpush1.bf16.msra.mxu0 %v652
        %673 = vmatprep.subr.bf16.mxu0 0
        %674 = vmatpush2.bf16.msra.mxu0 0
        %675 = vmatprep.subr.bf16.mxu0 0
        %676 = vmatpush2.bf16.msra.mxu0 0
        %677 = vmatprep.subr.bf16.mxu0 0
        %678 = vmatpush2.bf16.msra.mxu0 0
        %679 = vmatprep.subr.bf16.mxu0 0
        %680 = vmatpush2.bf16.msra.mxu0 0
        %681 = vmatprep.subr.bf16.mxu0 0
        %682 = vmatpush2.bf16.msra.mxu0 0
        %683 = vmatprep.subr.bf16.mxu0 0
        %684 = vmatpush2.bf16.msra.mxu0 0
        %685 = vmatprep.subr.bf16.mxu0 0
        %686 = vmatpush2.bf16.msra.mxu0 0
        %687 = vmatprep.subr.bf16.mxu0 0
        %688 = vmatpush2.bf16.msra.mxu0 0
        %689 = vmatprep.mubr.bf16.mxu0 0
        %690 = vmatmul.mubr.bf16.gmra.mxu0 %v607
        %v691 = vpop.f32.mrf.mxu0
        %v692 = vadd.f32 0.0, %v691
        %v693 = vpop.f32.mrf.mxu0
        %v694 = vpop.f32.mrf.mxu0
        %v695 = vpop.f32.mrf.mxu0
        %696 = vdwg.mxu0
        %v697 = vrcp.pop %v644
        %vm698 = vcmask 31744
        %v700 = vsel %vm698, %v697, 0
        %v703 = vsel %vm506, %v429, 0
        %705 = vmatprep.subr.mxu0 0.0
        %706 = vmatpush1.msra.mxu0 0.0
        %707 = vmatprep.subr.mxu0 0.0
        %708 = vmatpush1.msra.mxu0 0.0
        %709 = vmatprep.subr.mxu0 0.0
        %710 = vmatpush1.msra.mxu0 0.0
        %711 = vmatprep.subr.mxu0 0.0
        %712 = vmatpush1.msra.mxu0 0.0
        %713 = vmatprep.subr.mxu0 0.0
        %714 = vmatpush1.msra.mxu0 0.0
        %715 = vmatprep.subr.mxu0 0.0
        %716 = vmatpush1.msra.mxu0 0.0
        %717 = vmatprep.subr.mxu0 0.0
        %718 = vmatpush1.msra.mxu0 0.0
        %719 = vmatprep.subr.mxu0 0.0
        %720 = vmatpush1.msra.mxu0 0.0
        %721 = vmatprep.subr.mxu0 0.0
        %722 = vmatpush1.msra.mxu0 0.0
        %723 = vmatprep.subr.mxu0 0.0
        %724 = vmatpush1.msra.mxu0 0.0
        %725 = vmatprep.subr.mxu0 0.0
        %726 = vmatpush1.msra.mxu0 0.0
        %727 = vmatprep.subr.mxu0 0.0
        %728 = vmatpush1.msra.mxu0 0.0
        %729 = vmatprep.subr.mxu0 0.0
        %730 = vmatpush1.msra.mxu0 0.0
        %731 = vmatprep.subr.mxu0 0.0
        %732 = vmatpush1.msra.mxu0 0.0
        %733 = vmatprep.subr.mxu0 0.0
        %734 = vmatpush1.msra.mxu0 0.0
        %735 = vmatprep.subr.mxu0 0.0
        %736 = vmatpush1.msra.mxu0 %v703
        %737 = vmatprep.subr.mxu0 0.0
        %738 = vmatpush2.msra.mxu0 0.0
        %739 = vmatprep.subr.mxu0 0.0
        %740 = vmatpush2.msra.mxu0 0.0
        %741 = vmatprep.subr.mxu0 0.0
        %742 = vmatpush2.msra.mxu0 0.0
        %743 = vmatprep.subr.mxu0 0.0
        %744 = vmatpush2.msra.mxu0 0.0
        %745 = vmatprep.subr.mxu0 0.0
        %746 = vmatpush2.msra.mxu0 0.0
        %747 = vmatprep.subr.mxu0 0.0
        %748 = vmatpush2.msra.mxu0 0.0
        %749 = vmatprep.subr.mxu0 0.0
        %750 = vmatpush2.msra.mxu0 0.0
        %751 = vmatprep.subr.mxu0 0.0
        %752 = vmatpush2.msra.mxu0 0.0
        %753 = vmatprep.subr.mxu0 0.0
        %754 = vmatpush2.msra.mxu0 0.0
        %755 = vmatprep.subr.mxu0 0.0
        %756 = vmatpush2.msra.mxu0 0.0
        %757 = vmatprep.subr.mxu0 0.0
        %758 = vmatpush2.msra.mxu0 0.0
        %759 = vmatprep.subr.mxu0 0.0
        %760 = vmatpush2.msra.mxu0 0.0
        %761 = vmatprep.subr.mxu0 0.0
        %762 = vmatpush2.msra.mxu0 0.0
        %763 = vmatprep.subr.mxu0 0.0
        %764 = vmatpush2.msra.mxu0 0.0
        %765 = vmatprep.subr.mxu0 0.0
        %766 = vmatpush2.msra.mxu0 0.0
        %767 = vmatprep.subr.mxu0 0.0
        %768 = vmatpush2.msra.mxu0 0.0
        %769 = vmatprep.mubr.f32.mxu0 0.0
        %770 = vmatmul.mubr.f32.gmra.mxu0 %v700
        %v771 = vpop.f32.mrf.mxu0
        %v772 = vadd.f32 0.0, %v771
        %v773 = vpop.f32.mrf.mxu0
        %774 = vdwg.mxu0
        %v775 = vmul.f32 %v692, %v772
        %v776 = vpack.c.bf16 %v775, %v775
        %v777 = vld [vmem:[#allocation7 + $0x10] sm:$0xf]
        %v778 = vld [vmem:[#allocation7 + $0x14] sm:$0xf]
        %v779 = vld [vmem:[#allocation7 + $0x18] sm:$0xf]
        %v780 = vld [vmem:[#allocation7 + $0x1c] sm:$0xf]
        %v781 = vld [vmem:[#allocation8 + $0x1] sm:$0x1]
        %v782 = vlaneseq
        %v783 = vshrl.u32 %v782, 7
        %v784 = vsub.s32 0, %v783
        %v785 = vrot.slane %v781, %v784
        %v790 = vunpack.c.l.b16 %v777
        %v791 = vunpack.c.l.b16 %v778
        %v792 = vunpack.c.l.b16 %v779
        %v793 = vunpack.c.l.b16 %v780
        %v794 = vpack.c.b16 %v791, %v790
        %v795 = vpack.c.b16 %v793, %v792
        %v799 = vsel %vm454, %v776, 0
        %801 = vmatprep.subr.bf16.mxu0 0
        %802 = vmatpush1.bf16.msra.mxu0 0
        %803 = vmatprep.subr.bf16.mxu0 0
        %804 = vmatpush1.bf16.msra.mxu0 0
        %805 = vmatprep.subr.bf16.mxu0 0
        %806 = vmatpush1.bf16.msra.mxu0 0
        %807 = vmatprep.subr.bf16.mxu0 0
        %808 = vmatpush1.bf16.msra.mxu0 0
        %809 = vmatprep.subr.bf16.mxu0 0
        %810 = vmatpush1.bf16.msra.mxu0 0
        %811 = vmatprep.subr.bf16.mxu0 0
        %812 = vmatpush1.bf16.msra.mxu0 0
        %813 = vmatprep.subr.bf16.mxu0 0
        %814 = vmatpush1.bf16.msra.mxu0 %v795
        %815 = vmatprep.subr.bf16.mxu0 0
        %816 = vmatpush1.bf16.msra.mxu0 %v794
        %817 = vmatprep.subr.bf16.mxu0 0
        %818 = vmatpush2.bf16.msra.mxu0 0
        %819 = vmatprep.subr.bf16.mxu0 0
        %820 = vmatpush2.bf16.msra.mxu0 0
        %821 = vmatprep.subr.bf16.mxu0 0
        %822 = vmatpush2.bf16.msra.mxu0 0
        %823 = vmatprep.subr.bf16.mxu0 0
        %824 = vmatpush2.bf16.msra.mxu0 0
        %825 = vmatprep.subr.bf16.mxu0 0
        %826 = vmatpush2.bf16.msra.mxu0 0
        %827 = vmatprep.subr.bf16.mxu0 0
        %828 = vmatpush2.bf16.msra.mxu0 0
        %829 = vmatprep.subr.bf16.mxu0 0
        %830 = vmatpush2.bf16.msra.mxu0 0
        %831 = vmatprep.subr.bf16.mxu0 0
        %832 = vmatpush2.bf16.msra.mxu0 0
        %833 = vmatprep.mubr.bf16.mxu0 0
        %834 = vmatmul.mubr.bf16.gmra.mxu0 %v799
        %v835 = vpop.f32.mrf.mxu0
        %v836 = vadd.f32 %v785, %v835
        %v837 = vpop.f32.mrf.mxu0
        %v838 = vpop.f32.mrf.mxu0
        %v839 = vpop.f32.mrf.mxu0
        %840 = vdwg.mxu0
        %v841 = vadd.f32 %v430, %v836
        %v842 = vld [vmem:[#allocation8 + $0x7] sm:$0x1]
        %v843 = vld [vmem:[#allocation8 + $0x8] sm:$0x1]
        %v844 = vsel %vm454, %v841, 0.0
        %845 = vadd.xlane.f32.xlu0 %v844
        %v846 = vpop.xlane.xlu0 %845
        %v847 = vrcp.pop 32.0
        %v848 = vmul.f32 %v846, %v847
        %v849 = vsub.f32 %v841, %v848
        %v850 = vmul.f32 %v849, %v849
        %v851 = vsel %vm454, %v850, 0.0
        %852 = vadd.xlane.f32.xlu0 %v851
        %v853 = vpop.xlane.xlu0 %852
        %v854 = vmul.f32 %v853, %v847
        %v855 = vadd.f32 %v854, 1e-05
        %v856 = vrsqrt.pop %v855
        %v857 = vmul.f32 %v849, %v856
        %v858 = vlaneseq
        %v859 = vshrl.u32 %v858, 7
        %v860 = vsub.s32 0, %v859
        %v861 = vrot.slane %v842, %v860
        %v862 = vmul.f32 %v857, %v861
        %v863 = vlaneseq
        %v864 = vshrl.u32 %v863, 7
        %v865 = vsub.s32 0, %v864
        %v866 = vrot.slane %v843, %v865
        %v867 = vadd.f32 %v862, %v866
        %v868 = vpack.c.bf16 %v867, %v867
        %v869 = vld [vmem:[#allocation7 + $0x20] sm:$0xf]
        %v870 = vld [vmem:[#allocation7 + $0x24] sm:$0xf]
        %v871 = vld [vmem:[#allocation7 + $0x28] sm:$0xf]
        %v872 = vld [vmem:[#allocation7 + $0x2c] sm:$0xf]
        %v873 = vld [vmem:[#allocation8 + $0x2] sm:$0x1]
        %v874 = vlaneseq
        %v875 = vshrl.u32 %v874, 7
        %v876 = vsub.s32 0, %v875
        %v877 = vrot.slane %v873, %v876
        %v882 = vunpack.c.l.b16 %v869
        %v883 = vunpack.c.l.b16 %v870
        %v884 = vunpack.c.l.b16 %v871
        %v885 = vunpack.c.l.b16 %v872
        %v886 = vpack.c.b16 %v883, %v882
        %v887 = vpack.c.b16 %v885, %v884
        %v891 = vsel %vm454, %v868, 0
        %893 = vmatprep.subr.bf16.mxu0 0
        %894 = vmatpush1.bf16.msra.mxu0 0
        %895 = vmatprep.subr.bf16.mxu0 0
        %896 = vmatpush1.bf16.msra.mxu0 0
        %897 = vmatprep.subr.bf16.mxu0 0
        %898 = vmatpush1.bf16.msra.mxu0 0
        %899 = vmatprep.subr.bf16.mxu0 0
        %900 = vmatpush1.bf16.msra.mxu0 0
        %901 = vmatprep.subr.bf16.mxu0 0
        %902 = vmatpush1.bf16.msra.mxu0 0
        %903 = vmatprep.subr.bf16.mxu0 0
        %904 = vmatpush1.bf16.msra.mxu0 0
        %905 = vmatprep.subr.bf16.mxu0 0
        %906 = vmatpush1.bf16.msra.mxu0 %v887
        %907 = vmatprep.subr.bf16.mxu0 0
        %908 = vmatpush1.bf16.msra.mxu0 %v886
        %909 = vmatprep.subr.bf16.mxu0 0
        %910 = vmatpush2.bf16.msra.mxu0 0
        %911 = vmatprep.subr.bf16.mxu0 0
        %912 = vmatpush2.bf16.msra.mxu0 0
        %913 = vmatprep.subr.bf16.mxu0 0
        %914 = vmatpush2.bf16.msra.mxu0 0
        %915 = vmatprep.subr.bf16.mxu0 0
        %916 = vmatpush2.bf16.msra.mxu0 0
        %917 = vmatprep.subr.bf16.mxu0 0
        %918 = vmatpush2.bf16.msra.mxu0 0
        %919 = vmatprep.subr.bf16.mxu0 0
        %920 = vmatpush2.bf16.msra.mxu0 0
        %921 = vmatprep.subr.bf16.mxu0 0
        %922 = vmatpush2.bf16.msra.mxu0 0
        %923 = vmatprep.subr.bf16.mxu0 0
        %924 = vmatpush2.bf16.msra.mxu0 0
        %925 = vmatprep.mubr.bf16.mxu0 0
        %926 = vmatmul.mubr.bf16.gmra.mxu0 %v891
        %v927 = vpop.f32.mrf.mxu0
        %v928 = vadd.f32 %v877, %v927
        %v929 = vpop.f32.mrf.mxu0
        %v930 = vpop.f32.mrf.mxu0
        %v931 = vpop.f32.mrf.mxu0
        %932 = vdwg.mxu0
        %v933 = vpack.c.bf16 %v431, %v431
        %v934 = vld [vmem:[#allocation7 + $0x30] sm:$0xf]
        %v935 = vld [vmem:[#allocation7 + $0x34] sm:$0xf]
        %v936 = vld [vmem:[#allocation7 + $0x38] sm:$0xf]
        %v937 = vld [vmem:[#allocation7 + $0x3c] sm:$0xf]
        %v938 = vld [vmem:[#allocation8 + $0x3] sm:$0x1]
        %v939 = vlaneseq
        %v940 = vshrl.u32 %v939, 7
        %v941 = vsub.s32 0, %v940
        %v942 = vrot.slane %v938, %v941
        %v947 = vunpack.c.l.b16 %v934
        %v948 = vunpack.c.l.b16 %v935
        %v949 = vunpack.c.l.b16 %v936
        %v950 = vunpack.c.l.b16 %v937
        %v951 = vpack.c.b16 %v948, %v947
        %v952 = vpack.c.b16 %v950, %v949
        %v956 = vsel %vm454, %v933, 0
        %958 = vmatprep.subr.bf16.mxu0 0
        %959 = vmatpush1.bf16.msra.mxu0 0
        %960 = vmatprep.subr.bf16.mxu0 0
        %961 = vmatpush1.bf16.msra.mxu0 0
        %962 = vmatprep.subr.bf16.mxu0 0
        %963 = vmatpush1.bf16.msra.mxu0 0
        %964 = vmatprep.subr.bf16.mxu0 0
        %965 = vmatpush1.bf16.msra.mxu0 0
        %966 = vmatprep.subr.bf16.mxu0 0
        %967 = vmatpush1.bf16.msra.mxu0 0
        %968 = vmatprep.subr.bf16.mxu0 0
        %969 = vmatpush1.bf16.msra.mxu0 0
        %970 = vmatprep.subr.bf16.mxu0 0
        %971 = vmatpush1.bf16.msra.mxu0 %v952
        %972 = vmatprep.subr.bf16.mxu0 0
        %973 = vmatpush1.bf16.msra.mxu0 %v951
        %974 = vmatprep.subr.bf16.mxu0 0
        %975 = vmatpush2.bf16.msra.mxu0 0
        %976 = vmatprep.subr.bf16.mxu0 0
        %977 = vmatpush2.bf16.msra.mxu0 0
        %978 = vmatprep.subr.bf16.mxu0 0
        %979 = vmatpush2.bf16.msra.mxu0 0
        %980 = vmatprep.subr.bf16.mxu0 0
        %981 = vmatpush2.bf16.msra.mxu0 0
        %982 = vmatprep.subr.bf16.mxu0 0
        %983 = vmatpush2.bf16.msra.mxu0 0
        %984 = vmatprep.subr.bf16.mxu0 0
        %985 = vmatpush2.bf16.msra.mxu0 0
        %986 = vmatprep.subr.bf16.mxu0 0
        %987 = vmatpush2.bf16.msra.mxu0 0
        %988 = vmatprep.subr.bf16.mxu0 0
        %989 = vmatpush2.bf16.msra.mxu0 0
        %990 = vmatprep.mubr.bf16.mxu0 0
        %991 = vmatmul.mubr.bf16.gmra.mxu0 %v956
        %v992 = vpop.f32.mrf.mxu0
        %v993 = vadd.f32 %v942, %v992
        %v994 = vpop.f32.mrf.mxu0
        %v995 = vpop.f32.mrf.mxu0
        %v996 = vpop.f32.mrf.mxu0
        %997 = vdwg.mxu0
        %v998 = vld [vmem:[#allocation11] sm:$0xf]
        %v999 = vld [vmem:[#allocation11 + $0x4] sm:$0xf]
        %v1000 = vld [vmem:[#allocation11 + $0x8] sm:$0xf]
        %v1001 = vld [vmem:[#allocation11 + $0xc] sm:$0xf]
        %v1002 = vld [vmem:[#allocation13] sm:$0xff]
        %v1003 = vpack.c.bf16 %v993, %v993
        %v1005 = vrot.slane %v1003, 4
        %v1008 = vsel %vm506, %v1003, %v1005
        %v1014 = vunpack.c.l.b16 %v998
        %v1015 = vunpack.c.l.b16 %v999
        %v1016 = vunpack.c.l.b16 %v1000
        %v1017 = vunpack.c.l.b16 %v1001
        %v1018 = vpack.c.b16 %v1015, %v1014
        %v1019 = vpack.c.b16 %v1017, %v1016
        %v1022 = vmul.bf16 %v1008, %v1018
        %v1023 = vmul.bf16 %v1008, %v1019
        %1024 = vrot.lane.b32.xlu0 %v1018, 32
        %v1025 = vpop.permute.xlu0 %1024
        %1026 = vrot.lane.b32.xlu0 %v1019, 32
        %v1027 = vpop.permute.xlu0 %1026
        %v1030 = vmul.bf16 %v1008, %v1025
        %v1031 = vmul.bf16 %v1008, %v1027
        %v1032 = vpack.c.bf16 %v928, %v928
        %v1034 = vsel %vm454, %v1032, 0
        %v1037 = vsel %vm454, %v1022, 0
        %v1040 = vsel %vm454, %v1023, 0
        %1042 = vmatprep.subr.bf16.mxu0 0
        %1043 = vmatpush1.bf16.xpose.msra.mxu0 0
        %1044 = vmatprep.subr.bf16.mxu0 0
        %1045 = vmatpush1.bf16.xpose.msra.mxu0 0
        %1046 = vmatprep.subr.bf16.mxu0 0
        %1047 = vmatpush1.bf16.xpose.msra.mxu0 0
        %1048 = vmatprep.subr.bf16.mxu0 0
        %1049 = vmatpush1.bf16.xpose.msra.mxu0 0
        %1050 = vmatprep.subr.bf16.mxu0 0
        %1051 = vmatpush1.bf16.xpose.msra.mxu0 0
        %1052 = vmatprep.subr.bf16.mxu0 0
        %1053 = vmatpush1.bf16.xpose.msra.mxu0 0
        %1054 = vmatprep.subr.bf16.mxu0 0
        %1055 = vmatpush1.bf16.xpose.msra.mxu0 %v1040
        %1056 = vmatprep.subr.bf16.mxu0 0
        %1057 = vmatpush1.bf16.xpose.msra.mxu0 %v1037
        %1058 = vmatprep.subr.bf16.mxu0 0
        %1059 = vmatpush2.bf16.xpose.msra.mxu0 0
        %1060 = vmatprep.subr.bf16.mxu0 0
        %1061 = vmatpush2.bf16.xpose.msra.mxu0 0
        %1062 = vmatprep.subr.bf16.mxu0 0
        %1063 = vmatpush2.bf16.xpose.msra.mxu0 0
        %1064 = vmatprep.subr.bf16.mxu0 0
        %1065 = vmatpush2.bf16.xpose.msra.mxu0 0
        %1066 = vmatprep.subr.bf16.mxu0 0
        %1067 = vmatpush2.bf16.xpose.msra.mxu0 0
        %1068 = vmatprep.subr.bf16.mxu0 0
        %1069 = vmatpush2.bf16.xpose.msra.mxu0 0
        %1070 = vmatprep.subr.bf16.mxu0 0
        %1071 = vmatpush2.bf16.xpose.msra.mxu0 0
        %1072 = vmatprep.subr.bf16.mxu0 0
        %1073 = vmatpush2.bf16.xpose.msra.mxu0 0
        %1074 = vmatprep.mubr.bf16.mxu0 0
        %1075 = vmatmul.mubr.bf16.gmra.mxu0 %v1034
        %v1076 = vpop.f32.mrf.mxu0
        %v1077 = vadd.f32 0.0, %v1076
        %v1078 = vpop.f32.mrf.mxu0
        %v1079 = vpop.f32.mrf.mxu0
        %v1080 = vpop.f32.mrf.mxu0
        %1081 = vdwg.mxu0
        %v1082 = vmul.f32 %v1077, 0.35355338
        %v1083 = vadd.f32 %v1082, %v1002
        %v1084 = vsel %vm454, %v1083, -inf
        %1085 = vmax.xlane.f32.xlu0 %v1084
        %v1086 = vpop.xlane.xlu0 %1085
        %v1087 = vsub.f32 %v1083, %v1086
        %v1088 = vmul.f32 %v1087, 1.442695
        %v1089 = vpow.pop %v1088
        %v1090 = vpack.c.bf16 %v1089, %v1089
        %1091 = vrot.lane.b32.xlu0 %v1018, 96
        %v1092 = vpop.permute.xlu0 %1091
        %1093 = vrot.lane.b32.xlu0 %v1019, 96
        %v1094 = vpop.permute.xlu0 %1093
        %v1098 = vsel %vm454, %v1090, 0
        %1100 = vmatprep.subr.bf16.mxu0 0
        %1101 = vmatpush1.bf16.msra.mxu0 0
        %1102 = vmatprep.subr.bf16.mxu0 0
        %1103 = vmatpush1.bf16.msra.mxu0 0
        %1104 = vmatprep.subr.bf16.mxu0 0
        %1105 = vmatpush1.bf16.msra.mxu0 0
        %1106 = vmatprep.subr.bf16.mxu0 0
        %1107 = vmatpush1.bf16.msra.mxu0 0
        %1108 = vmatprep.subr.bf16.mxu0 0
        %1109 = vmatpush1.bf16.msra.mxu0 0
        %1110 = vmatprep.subr.bf16.mxu0 0
        %1111 = vmatpush1.bf16.msra.mxu0 0
        %1112 = vmatprep.subr.bf16.mxu0 0
        %1113 = vmatpush1.bf16.msra.mxu0 %v1094
        %1114 = vmatprep.subr.bf16.mxu0 0
        %1115 = vmatpush1.bf16.msra.mxu0 %v1092
        %1116 = vmatprep.subr.bf16.mxu0 0
        %1117 = vmatpush2.bf16.msra.mxu0 0
        %1118 = vmatprep.subr.bf16.mxu0 0
        %1119 = vmatpush2.bf16.msra.mxu0 0
        %1120 = vmatprep.subr.bf16.mxu0 0
        %1121 = vmatpush2.bf16.msra.mxu0 0
        %1122 = vmatprep.subr.bf16.mxu0 0
        %1123 = vmatpush2.bf16.msra.mxu0 0
        %1124 = vmatprep.subr.bf16.mxu0 0
        %1125 = vmatpush2.bf16.msra.mxu0 0
        %1126 = vmatprep.subr.bf16.mxu0 0
        %1127 = vmatpush2.bf16.msra.mxu0 0
        %1128 = vmatprep.subr.bf16.mxu0 0
        %1129 = vmatpush2.bf16.msra.mxu0 0
        %1130 = vmatprep.subr.bf16.mxu0 0
        %1131 = vmatpush2.bf16.msra.mxu0 0
        %1132 = vmatprep.mubr.bf16.mxu0 0
        %1133 = vmatmul.mubr.bf16.gmra.mxu0 %v1098
        %v1134 = vpop.f32.mrf.mxu0
        %v1135 = vadd.f32 0.0, %v1134
        %v1136 = vpop.f32.mrf.mxu0
        %v1137 = vpop.f32.mrf.mxu0
        %v1138 = vpop.f32.mrf.mxu0
        %1139 = vdwg.mxu0
        %1142 = vrot.lane.b32.xlu0 %v1030, 96
        %v1143 = vpop.permute.xlu0 %1142
        %1144 = vrot.lane.b32.xlu0 %v1031, 96
        %v1145 = vpop.permute.xlu0 %1144
        %1148 = vmatprep.subr.bf16.mxu0 0
        %1149 = vmatpush1.bf16.msra.mxu0 0
        %1150 = vmatprep.subr.bf16.mxu0 0
        %1151 = vmatpush1.bf16.msra.mxu0 0
        %1152 = vmatprep.subr.bf16.mxu0 0
        %1153 = vmatpush1.bf16.msra.mxu0 0
        %1154 = vmatprep.subr.bf16.mxu0 0
        %1155 = vmatpush1.bf16.msra.mxu0 0
        %1156 = vmatprep.subr.bf16.mxu0 0
        %1157 = vmatpush1.bf16.msra.mxu0 0
        %1158 = vmatprep.subr.bf16.mxu0 0
        %1159 = vmatpush1.bf16.msra.mxu0 0
        %1160 = vmatprep.subr.bf16.mxu0 0
        %1161 = vmatpush1.bf16.msra.mxu0 %v1145
        %1162 = vmatprep.subr.bf16.mxu0 0
        %1163 = vmatpush1.bf16.msra.mxu0 %v1143
        %1164 = vmatprep.subr.bf16.mxu0 0
        %1165 = vmatpush2.bf16.msra.mxu0 0
        %1166 = vmatprep.subr.bf16.mxu0 0
        %1167 = vmatpush2.bf16.msra.mxu0 0
        %1168 = vmatprep.subr.bf16.mxu0 0
        %1169 = vmatpush2.bf16.msra.mxu0 0
        %1170 = vmatprep.subr.bf16.mxu0 0
        %1171 = vmatpush2.bf16.msra.mxu0 0
        %1172 = vmatprep.subr.bf16.mxu0 0
        %1173 = vmatpush2.bf16.msra.mxu0 0
        %1174 = vmatprep.subr.bf16.mxu0 0
        %1175 = vmatpush2.bf16.msra.mxu0 0
        %1176 = vmatprep.subr.bf16.mxu0 0
        %1177 = vmatpush2.bf16.msra.mxu0 0
        %1178 = vmatprep.subr.bf16.mxu0 0
        %1179 = vmatpush2.bf16.msra.mxu0 0
        %1180 = vmatprep.mubr.bf16.mxu0 0
        %1181 = vmatmul.mubr.bf16.gmra.mxu0 %v1098
        %v1182 = vpop.f32.mrf.mxu0
        %v1183 = vadd.f32 0.0, %v1182
        %v1184 = vpop.f32.mrf.mxu0
        %v1185 = vpop.f32.mrf.mxu0
        %v1186 = vpop.f32.mrf.mxu0
        %1187 = vdwg.mxu0
        %v1188 = vrcp.pop %v1135
        %v1190 = vsel %vm698, %v1188, 0
        %1192 = vmatprep.subr.mxu0 0.0
        %1193 = vmatpush1.msra.mxu0 0.0
        %1194 = vmatprep.subr.mxu0 0.0
        %1195 = vmatpush1.msra.mxu0 0.0
        %1196 = vmatprep.subr.mxu0 0.0
        %1197 = vmatpush1.msra.mxu0 0.0
        %1198 = vmatprep.subr.mxu0 0.0
        %1199 = vmatpush1.msra.mxu0 0.0
        %1200 = vmatprep.subr.mxu0 0.0
        %1201 = vmatpush1.msra.mxu0 0.0
        %1202 = vmatprep.subr.mxu0 0.0
        %1203 = vmatpush1.msra.mxu0 0.0
        %1204 = vmatprep.subr.mxu0 0.0
        %1205 = vmatpush1.msra.mxu0 0.0
        %1206 = vmatprep.subr.mxu0 0.0
        %1207 = vmatpush1.msra.mxu0 0.0
        %1208 = vmatprep.subr.mxu0 0.0
        %1209 = vmatpush1.msra.mxu0 0.0
        %1210 = vmatprep.subr.mxu0 0.0
        %1211 = vmatpush1.msra.mxu0 0.0
        %1212 = vmatprep.subr.mxu0 0.0
        %1213 = vmatpush1.msra.mxu0 0.0
        %1214 = vmatprep.subr.mxu0 0.0
        %1215 = vmatpush1.msra.mxu0 0.0
        %1216 = vmatprep.subr.mxu0 0.0
        %1217 = vmatpush1.msra.mxu0 0.0
        %1218 = vmatprep.subr.mxu0 0.0
        %1219 = vmatpush1.msra.mxu0 0.0
        %1220 = vmatprep.subr.mxu0 0.0
        %1221 = vmatpush1.msra.mxu0 0.0
        %1222 = vmatprep.subr.mxu0 0.0
        %1223 = vmatpush1.msra.mxu0 %v703
        %1224 = vmatprep.subr.mxu0 0.0
        %1225 = vmatpush2.msra.mxu0 0.0
        %1226 = vmatprep.subr.mxu0 0.0
        %1227 = vmatpush2.msra.mxu0 0.0
        %1228 = vmatprep.subr.mxu0 0.0
        %1229 = vmatpush2.msra.mxu0 0.0
        %1230 = vmatprep.subr.mxu0 0.0
        %1231 = vmatpush2.msra.mxu0 0.0
        %1232 = vmatprep.subr.mxu0 0.0
        %1233 = vmatpush2.msra.mxu0 0.0
        %1234 = vmatprep.subr.mxu0 0.0
        %1235 = vmatpush2.msra.mxu0 0.0
        %1236 = vmatprep.subr.mxu0 0.0
        %1237 = vmatpush2.msra.mxu0 0.0
        %1238 = vmatprep.subr.mxu0 0.0
        %1239 = vmatpush2.msra.mxu0 0.0
        %1240 = vmatprep.subr.mxu0 0.0
        %1241 = vmatpush2.msra.mxu0 0.0
        %1242 = vmatprep.subr.mxu0 0.0
        %1243 = vmatpush2.msra.mxu0 0.0
        %1244 = vmatprep.subr.mxu0 0.0
        %1245 = vmatpush2.msra.mxu0 0.0
        %1246 = vmatprep.subr.mxu0 0.0
        %1247 = vmatpush2.msra.mxu0 0.0
        %1248 = vmatprep.subr.mxu0 0.0
        %1249 = vmatpush2.msra.mxu0 0.0
        %1250 = vmatprep.subr.mxu0 0.0
        %1251 = vmatpush2.msra.mxu0 0.0
        %1252 = vmatprep.subr.mxu0 0.0
        %1253 = vmatpush2.msra.mxu0 0.0
        %1254 = vmatprep.subr.mxu0 0.0
        %1255 = vmatpush2.msra.mxu0 0.0
        %1256 = vmatprep.mubr.f32.mxu0 0.0
        %1257 = vmatmul.mubr.f32.gmra.mxu0 %v1190
        %v1258 = vpop.f32.mrf.mxu0
        %v1259 = vadd.f32 0.0, %v1258
        %v1260 = vpop.f32.mrf.mxu0
        %1261 = vdwg.mxu0
        %v1262 = vmul.f32 %v1183, %v1259
        %v1263 = vpack.c.bf16 %v1262, %v1262
        %v1264 = vld [vmem:[#allocation7 + $0x40] sm:$0xf]
        %v1265 = vld [vmem:[#allocation7 + $0x44] sm:$0xf]
        %v1266 = vld [vmem:[#allocation7 + $0x48] sm:$0xf]
        %v1267 = vld [vmem:[#allocation7 + $0x4c] sm:$0xf]
        %v1268 = vld [vmem:[#allocation8 + $0x4] sm:$0x1]
        %v1269 = vlaneseq
        %v1270 = vshrl.u32 %v1269, 7
        %v1271 = vsub.s32 0, %v1270
        %v1272 = vrot.slane %v1268, %v1271
        %v1277 = vunpack.c.l.b16 %v1264
        %v1278 = vunpack.c.l.b16 %v1265
        %v1279 = vunpack.c.l.b16 %v1266
        %v1280 = vunpack.c.l.b16 %v1267
        %v1281 = vpack.c.b16 %v1278, %v1277
        %v1282 = vpack.c.b16 %v1280, %v1279
        %v1286 = vsel %vm454, %v1263, 0
        %1288 = vmatprep.subr.bf16.mxu0 0
        %1289 = vmatpush1.bf16.msra.mxu0 0
        %1290 = vmatprep.subr.bf16.mxu0 0
        %1291 = vmatpush1.bf16.msra.mxu0 0
        %1292 = vmatprep.subr.bf16.mxu0 0
        %1293 = vmatpush1.bf16.msra.mxu0 0
        %1294 = vmatprep.subr.bf16.mxu0 0
        %1295 = vmatpush1.bf16.msra.mxu0 0
        %1296 = vmatprep.subr.bf16.mxu0 0
        %1297 = vmatpush1.bf16.msra.mxu0 0
        %1298 = vmatprep.subr.bf16.mxu0 0
        %1299 = vmatpush1.bf16.msra.mxu0 0
        %1300 = vmatprep.subr.bf16.mxu0 0
        %1301 = vmatpush1.bf16.msra.mxu0 %v1282
        %1302 = vmatprep.subr.bf16.mxu0 0
        %1303 = vmatpush1.bf16.msra.mxu0 %v1281
        %1304 = vmatprep.subr.bf16.mxu0 0
        %1305 = vmatpush2.bf16.msra.mxu0 0
        %1306 = vmatprep.subr.bf16.mxu0 0
        %1307 = vmatpush2.bf16.msra.mxu0 0
        %1308 = vmatprep.subr.bf16.mxu0 0
        %1309 = vmatpush2.bf16.msra.mxu0 0
        %1310 = vmatprep.subr.bf16.mxu0 0
        %1311 = vmatpush2.bf16.msra.mxu0 0
        %1312 = vmatprep.subr.bf16.mxu0 0
        %1313 = vmatpush2.bf16.msra.mxu0 0
        %1314 = vmatprep.subr.bf16.mxu0 0
        %1315 = vmatpush2.bf16.msra.mxu0 0
        %1316 = vmatprep.subr.bf16.mxu0 0
        %1317 = vmatpush2.bf16.msra.mxu0 0
        %1318 = vmatprep.subr.bf16.mxu0 0
        %1319 = vmatpush2.bf16.msra.mxu0 0
        %1320 = vmatprep.mubr.bf16.mxu0 0
        %1321 = vmatmul.mubr.bf16.gmra.mxu0 %v1286
        %v1322 = vpop.f32.mrf.mxu0
        %v1323 = vadd.f32 %v1272, %v1322
        %v1324 = vpop.f32.mrf.mxu0
        %v1325 = vpop.f32.mrf.mxu0
        %v1326 = vpop.f32.mrf.mxu0
        %1327 = vdwg.mxu0
        %v1328 = vadd.f32 %v867, %v1323
        %v1329 = vld [vmem:[#allocation8 + $0x9] sm:$0x1]
        %v1330 = vld [vmem:[#allocation8 + $0xa] sm:$0x1]
        %v1331 = vsel %vm454, %v1328, 0.0
        %1332 = vadd.xlane.f32.xlu0 %v1331
        %v1333 = vpop.xlane.xlu0 %1332
        %v1334 = vmul.f32 %v1333, %v847
        %v1335 = vsub.f32 %v1328, %v1334
        %v1336 = vmul.f32 %v1335, %v1335
        %v1337 = vsel %vm454, %v1336, 0.0
        %1338 = vadd.xlane.f32.xlu0 %v1337
        %v1339 = vpop.xlane.xlu0 %1338
        %v1340 = vmul.f32 %v1339, %v847
        %v1341 = vadd.f32 %v1340, 1e-05
        %v1342 = vrsqrt.pop %v1341
        %v1343 = vmul.f32 %v1335, %v1342
        %v1344 = vlaneseq
        %v1345 = vshrl.u32 %v1344, 7
        %v1346 = vsub.s32 0, %v1345
        %v1347 = vrot.slane %v1329, %v1346
        %v1348 = vmul.f32 %v1343, %v1347
        %v1349 = vlaneseq
        %v1350 = vshrl.u32 %v1349, 7
        %v1351 = vsub.s32 0, %v1350
        %v1352 = vrot.slane %v1330, %v1351
        %v1353 = vadd.f32 %v1348, %v1352
        %v1354 = vpack.c.bf16 %v1353, %v1353
        %v1355 = vld [vmem:[#allocation7 + $0x50] sm:$0xf]
        %v1356 = vld [vmem:[#allocation7 + $0x54] sm:$0xf]
        %v1357 = vld [vmem:[#allocation7 + $0x58] sm:$0xf]
        %v1358 = vld [vmem:[#allocation7 + $0x5c] sm:$0xf]
        %v1359 = vld [vmem:[#allocation8 + $0x5] sm:$0x1]
        %v1360 = vlaneseq
        %v1361 = vshrl.u32 %v1360, 7
        %v1362 = vsub.s32 0, %v1361
        %v1363 = vrot.slane %v1359, %v1362
        %v1368 = vunpack.c.l.b16 %v1355
        %v1369 = vunpack.c.l.b16 %v1356
        %v1370 = vunpack.c.l.b16 %v1357
        %v1371 = vunpack.c.l.b16 %v1358
        %v1372 = vpack.c.b16 %v1369, %v1368
        %v1373 = vpack.c.b16 %v1371, %v1370
        %v1377 = vsel %vm454, %v1354, 0
        %1379 = vmatprep.subr.bf16.mxu0 0
        %1380 = vmatpush1.bf16.msra.mxu0 0
        %1381 = vmatprep.subr.bf16.mxu0 0
        %1382 = vmatpush1.bf16.msra.mxu0 0
        %1383 = vmatprep.subr.bf16.mxu0 0
        %1384 = vmatpush1.bf16.msra.mxu0 0
        %1385 = vmatprep.subr.bf16.mxu0 0
        %1386 = vmatpush1.bf16.msra.mxu0 0
        %1387 = vmatprep.subr.bf16.mxu0 0
        %1388 = vmatpush1.bf16.msra.mxu0 0
        %1389 = vmatprep.subr.bf16.mxu0 0
        %1390 = vmatpush1.bf16.msra.mxu0 0
        %1391 = vmatprep.subr.bf16.mxu0 0
        %1392 = vmatpush1.bf16.msra.mxu0 %v1373
        %1393 = vmatprep.subr.bf16.mxu0 0
        %1394 = vmatpush1.bf16.msra.mxu0 %v1372
        %1395 = vmatprep.subr.bf16.mxu0 0
        %1396 = vmatpush2.bf16.msra.mxu0 0
        %1397 = vmatprep.subr.bf16.mxu0 0
        %1398 = vmatpush2.bf16.msra.mxu0 0
        %1399 = vmatprep.subr.bf16.mxu0 0
        %1400 = vmatpush2.bf16.msra.mxu0 0
        %1401 = vmatprep.subr.bf16.mxu0 0
        %1402 = vmatpush2.bf16.msra.mxu0 0
        %1403 = vmatprep.subr.bf16.mxu0 0
        %1404 = vmatpush2.bf16.msra.mxu0 0
        %1405 = vmatprep.subr.bf16.mxu0 0
        %1406 = vmatpush2.bf16.msra.mxu0 0
        %1407 = vmatprep.subr.bf16.mxu0 0
        %1408 = vmatpush2.bf16.msra.mxu0 0
        %1409 = vmatprep.subr.bf16.mxu0 0
        %1410 = vmatpush2.bf16.msra.mxu0 0
        %1411 = vmatprep.mubr.bf16.mxu0 0
        %1412 = vmatmul.mubr.bf16.gmra.mxu0 %v1377
        %v1413 = vpop.f32.mrf.mxu0
        %v1414 = vadd.f32 %v1363, %v1413
        %v1415 = vpop.f32.mrf.mxu0
        %v1416 = vpop.f32.mrf.mxu0
        %v1417 = vpop.f32.mrf.mxu0
        %1418 = vdwg.mxu0
        %v1419 = vmax.f32 %v1414, 0.0
        %v1420 = vpack.c.bf16 %v1419, %v1419
        %v1421 = vld [vmem:[#allocation7 + $0x60] sm:$0xf]
        %v1422 = vld [vmem:[#allocation7 + $0x64] sm:$0xf]
        %v1423 = vld [vmem:[#allocation7 + $0x68] sm:$0xf]
        %v1424 = vld [vmem:[#allocation7 + $0x6c] sm:$0xf]
        %v1425 = vld [vmem:[#allocation7 + $0x70] sm:$0xf]
        %v1426 = vld [vmem:[#allocation7 + $0x74] sm:$0xf]
        %v1427 = vld [vmem:[#allocation7 + $0x78] sm:$0xf]
        %v1428 = vld [vmem:[#allocation7 + $0x7c] sm:$0xf]
        %v1429 = vld [vmem:[#allocation7 + $0x80] sm:$0xf]
        %v1430 = vld [vmem:[#allocation7 + $0x84] sm:$0xf]
        %v1431 = vld [vmem:[#allocation7 + $0x88] sm:$0xf]
        %v1432 = vld [vmem:[#allocation7 + $0x8c] sm:$0xf]
        %v1433 = vld [vmem:[#allocation7 + $0x90] sm:$0xf]
        %v1434 = vld [vmem:[#allocation7 + $0x94] sm:$0xf]
        %v1435 = vld [vmem:[#allocation7 + $0x98] sm:$0xf]
        %v1436 = vld [vmem:[#allocation7 + $0x9c] sm:$0xf]
        %v1437 = vld [vmem:[#allocation8 + $0x6] sm:$0x1]
        %v1438 = vlaneseq
        %v1439 = vshrl.u32 %v1438, 7
        %v1440 = vsub.s32 0, %v1439
        %v1441 = vrot.slane %v1437, %v1440
        %v1458 = vunpack.c.l.b16 %v1421
        %v1459 = vunpack.c.l.b16 %v1422
        %v1460 = vunpack.c.l.b16 %v1423
        %v1461 = vunpack.c.l.b16 %v1424
        %v1462 = vunpack.c.l.b16 %v1425
        %v1463 = vunpack.c.l.b16 %v1426
        %v1464 = vunpack.c.l.b16 %v1427
        %v1465 = vunpack.c.l.b16 %v1428
        %v1466 = vunpack.c.l.b16 %v1429
        %v1467 = vunpack.c.l.b16 %v1430
        %v1468 = vunpack.c.l.b16 %v1431
        %v1469 = vunpack.c.l.b16 %v1432
        %v1470 = vunpack.c.l.b16 %v1433
        %v1471 = vunpack.c.l.b16 %v1434
        %v1472 = vunpack.c.l.b16 %v1435
        %v1473 = vunpack.c.l.b16 %v1436
        %v1474 = vpack.c.b16 %v1459, %v1458
        %v1475 = vpack.c.b16 %v1461, %v1460
        %v1476 = vpack.c.b16 %v1463, %v1462
        %v1477 = vpack.c.b16 %v1465, %v1464
        %v1478 = vpack.c.b16 %v1467, %v1466
        %v1479 = vpack.c.b16 %v1469, %v1468
        %v1480 = vpack.c.b16 %v1471, %v1470
        %v1481 = vpack.c.b16 %v1473, %v1472
        %1490 = vmatprep.subr.bf16.mxu0 0
        %1491 = vmatpush1.bf16.msra.mxu0 %v1481
        %1492 = vmatprep.subr.bf16.mxu0 0
        %1493 = vmatpush1.bf16.msra.mxu0 %v1480
        %1494 = vmatprep.subr.bf16.mxu0 0
        %1495 = vmatpush1.bf16.msra.mxu0 %v1479
        %1496 = vmatprep.subr.bf16.mxu0 0
        %1497 = vmatpush1.bf16.msra.mxu0 %v1478
        %1498 = vmatprep.subr.bf16.mxu0 0
        %1499 = vmatpush1.bf16.msra.mxu0 %v1477
        %1500 = vmatprep.subr.bf16.mxu0 0
        %1501 = vmatpush1.bf16.msra.mxu0 %v1476
        %1502 = vmatprep.subr.bf16.mxu0 0
        %1503 = vmatpush1.bf16.msra.mxu0 %v1475
        %1504 = vmatprep.subr.bf16.mxu0 0
        %1505 = vmatpush1.bf16.msra.mxu0 %v1474
        %1506 = vmatprep.subr.bf16.mxu0 0
        %1507 = vmatpush2.bf16.msra.mxu0 0
        %1508 = vmatprep.subr.bf16.mxu0 0
        %1509 = vmatpush2.bf16.msra.mxu0 0
        %1510 = vmatprep.subr.bf16.mxu0 0
        %1511 = vmatpush2.bf16.msra.mxu0 0
        %1512 = vmatprep.subr.bf16.mxu0 0
        %1513 = vmatpush2.bf16.msra.mxu0 0
        %1514 = vmatprep.subr.bf16.mxu0 0
        %1515 = vmatpush2.bf16.msra.mxu0 0
        %1516 = vmatprep.subr.bf16.mxu0 0
        %1517 = vmatpush2.bf16.msra.mxu0 0
        %1518 = vmatprep.subr.bf16.mxu0 0
        %1519 = vmatpush2.bf16.msra.mxu0 0
        %1520 = vmatprep.subr.bf16.mxu0 0
        %1521 = vmatpush2.bf16.msra.mxu0 0
        %1522 = vmatprep.mubr.bf16.mxu0 0
        %1523 = vmatmul.mubr.bf16.gmra.mxu0 %v1420
        %v1524 = vpop.f32.mrf.mxu0
        %v1525 = vadd.f32 %v1441, %v1524
        %v1526 = vpop.f32.mrf.mxu0
        %v1527 = vpop.f32.mrf.mxu0
        %v1528 = vpop.f32.mrf.mxu0
        %1529 = vdwg.mxu0
        %v1530 = vadd.f32 %v1353, %v1525
        %v1531 = vld [vmem:[#allocation8 + $0xb] sm:$0x1]
        %v1532 = vld [vmem:[#allocation8 + $0xc] sm:$0x1]
        %v1533 = vsel %vm454, %v1530, 0.0
        %1534 = vadd.xlane.f32.xlu0 %v1533
        %v1535 = vpop.xlane.xlu0 %1534
        %v1536 = vmul.f32 %v1535, %v847
        %v1537 = vsub.f32 %v1530, %v1536
        %v1538 = vmul.f32 %v1537, %v1537
        %v1539 = vsel %vm454, %v1538, 0.0
        %1540 = vadd.xlane.f32.xlu0 %v1539
        %v1541 = vpop.xlane.xlu0 %1540
        %v1542 = vmul.f32 %v1541, %v847
        %v1543 = vadd.f32 %v1542, 1e-05
        %v1544 = vrsqrt.pop %v1543
        %v1545 = vmul.f32 %v1537, %v1544
        %v1546 = vlaneseq
        %v1547 = vshrl.u32 %v1546, 7
        %v1548 = vsub.s32 0, %v1547
        %v1549 = vrot.slane %v1531, %v1548
        %v1550 = vmul.f32 %v1545, %v1549
        %v1551 = vlaneseq
        %v1552 = vshrl.u32 %v1551, 7
        %v1553 = vsub.s32 0, %v1552
        %v1554 = vrot.slane %v1532, %v1553
        %v1555 = vadd.f32 %v1550, %v1554
        %v1556 = vsel %vm454, %v1555, 0.0
        %1557 = vst [vmem:[%s427] sm:$0xff] %v1556
        %s1558 = sand.u32 %s216, 1
        %s1559 = scalar_lea.sflag [#allocation4], %s1558
        %s1560 = sand.u32 %s216, 1
        %s1561 = smul.addr %s1560, 8
        %s1562 = scalar_lea.vmem [#allocation14], %s1561
        // Predicated region
        $region81: #{tpu_custom_call.1} parent=51 // pred_check
          %p1563 = pneg %p226
        $region82: #{tpu_custom_call.1} parent=51 // pred_check_branch
          %1565 = sbr.rel (%p1563) target = $region84
        $region83: #{tpu_custom_call.1} parent=51 // pred_region
          %s1567 = ssub.s32 128, 128
          %1568 = vsyncadd %s1559, %s1567
          %s1569 = smul.addr %s30, 128
          %s1570 = scalar_lea.hbm %s8, %s1569
          %s1572 = sshll.u32 %s1562, 4
          %s1573 = int_to_ptr.vmem [resolvable:$true] %s1572
          %1575 = dma.vmem_to_hbm [thread:$0]  %s1573, 128, %s1570, %s1559
        $region84: #{tpu_custom_call.1} parent=51 // pred_fallthru
          _
      $region52: #{tpu_custom_call.1} parent=5 // pred_fallthru
        _
      %p1576 = scmp.le.s32.totalorder 2, %s25
      // Predicated region
      $region85: #{tpu_custom_call.1} parent=5 // pred_check
        %p1577 = pneg %p1576
      $region86: #{tpu_custom_call.1} parent=5 // pred_check_branch
        %1579 = sbr.rel (%p1577) target = $region88
      $region87: #{tpu_custom_call.1} parent=5 // pred_region
        %s1580 = ssub.s32 %s25, 2
        // Predicated region
        $region89: #{tpu_custom_call.1} parent=87 // pred_check
          %p1581 = pneg %p232
        $region90: #{tpu_custom_call.1} parent=87 // pred_check_branch
          %1583 = sbr.rel (%p1581) target = $region92
        $region91: #{tpu_custom_call.1} parent=87 // pred_region
          %s1584 = sand.u32 %s217, 1
          %s1585 = scalar_lea.sflag [#allocation4], %s1584
          %s1586 = sand.u32 %s217, 1
          %s1587 = smul.addr %s1586, 8
          %s1588 = scalar_lea.vmem [#allocation14], %s1587
          %1589 = dma.done %s1585, 128
        $region92: #{tpu_custom_call.1} parent=87 // pred_fallthru
          _
      $region88: #{tpu_custom_call.1} parent=5 // pred_fallthru
        _
    $region6: #{tpu_custom_call.1} parent=1 // loop_footer
      %s29 = sadd.s32 1, %s25
    $region7: #{tpu_custom_call.1} parent=1 // loop_footer_branch
      %24 = sbr.rel target = $region3
    $region8: #{tpu_custom_call.1} parent=1 // loop_exit
      _
    %1590 = vsyncpa [#allocation3], 1
    %s1591 = scalar_lea.sflag [#allocation3], 1
    %1592 = vsyncpa %s1591, 1
    %1593 = vsyncpa [#allocation6], 1
    %s1594 = scalar_lea.sflag [#allocation6], 1
    %1595 = vsyncpa %s1594, 1
    %1596 = vsyncpa [#allocation9], 1
    %1597 = vsyncpa [#allocation12], 1
    %1598 = vsyncpa [#allocation4], 1
    %s1599 = scalar_lea.sflag [#allocation4], 1
    %1600 = vsyncpa %s1599, 1

</llo_original>
